<compile_context>
chip_gen: v6e
topology: v6e:2x2x1
jax: 0.10.0
libtpu: 0.0.40
codegen_flags: <defaults>
</compile_context>

<pallas_src>
import functools
import math

import jax
import jax.numpy as jnp
from jax.experimental import pallas as pl
from jax.experimental.pallas import tpu as pltpu


# ------------------------- tiling helpers -------------------------

def _pick_tile(dim, candidates):
    """Largest candidate that evenly divides `dim`, else the full dim (small-shape fallback)."""
    for c in candidates:
        if dim % c == 0:
            return c
    return dim


_M_TILES = (512, 256, 128, 64, 32, 16, 8)
_NK_TILES = (512, 384, 256, 128)


# ------------------------- dense (tiled matmul + bias + activation) -------------------------

def _dense_kernel(x_ref, w_ref, b_ref, o_ref, acc_ref, *, activation):
    # x: (tm, tk) bf16, w: (tk, tn) bf16, b: (1, tn) f32, acc: (tm, tn) f32
    @pl.when(pl.program_id(2) == 0)
    def _():
        acc_ref[...] = jnp.zeros_like(acc_ref)

    acc_ref[...] += jnp.dot(x_ref[...], w_ref[...],
                            preferred_element_type=jnp.float32)

    @pl.when(pl.program_id(2) == pl.num_programs(2) - 1)
    def _():
        y = acc_ref[...] + b_ref[...]
        if activation == "gelu":
            # tanh-approx GELU (HF BERT uses erf-GELU; numerical difference is ~1e-3)
            c = math.sqrt(2.0 / math.pi)
            y = 0.5 * y * (1.0 + jnp.tanh(c * (y + 0.044715 * y * y * y)))
        elif activation == "tanh":
            y = jnp.tanh(y)
        o_ref[...] = y.astype(o_ref.dtype)


def dense(x, w, b, activation=None, out_dtype=jnp.bfloat16):
    M, K = x.shape
    _, N = w.shape
    x = x.astype(jnp.bfloat16)
    w = w.astype(jnp.bfloat16)
    b = b.astype(jnp.float32).reshape(1, N)

    tm = _pick_tile(M, _M_TILES)
    tn = _pick_tile(N, _NK_TILES)
    tk = _pick_tile(K, _NK_TILES)
    grid = (M // tm, N // tn, K // tk)

    cost = pl.CostEstimate(
        flops=2 * M * N * K,
        transcendentals=M * N if activation in ("gelu", "tanh") else 0,
        bytes_accessed=int(2 * (M * K + K * N) + 4 * N
                           + M * N * jnp.dtype(out_dtype).itemsize),
    )

    return pl.pallas_call(
        functools.partial(_dense_kernel, activation=activation),
        out_shape=jax.ShapeDtypeStruct((M, N), out_dtype),
        grid=grid,
        in_specs=[
            pl.BlockSpec((tm, tk), lambda i, j, k: (i, k)),
            pl.BlockSpec((tk, tn), lambda i, j, k: (k, j)),
            pl.BlockSpec((1, tn), lambda i, j, k: (0, j)),
        ],
        out_specs=pl.BlockSpec((tm, tn), lambda i, j, k: (i, j)),
        scratch_shapes=[pltpu.VMEM((tm, tn), jnp.float32)],
        compiler_params=pltpu.CompilerParams(
            dimension_semantics=("parallel", "parallel", "arbitrary")),
        cost_estimate=cost,
    )(x, w, b)


# ------------------------- layernorm (row-tiled, residual fused) -------------------------

def _layernorm_kernel(*refs, eps, has_residual):
    if has_residual:
        x_ref, r_ref, g_ref, b_ref, o_ref = refs
        x = x_ref[...].astype(jnp.float32) + r_ref[...].astype(jnp.float32)
    else:
        x_ref, g_ref, b_ref, o_ref = refs
        x = x_ref[...].astype(jnp.float32)
    mu = jnp.mean(x, axis=-1, keepdims=True)
    xc = x - mu
    var = jnp.mean(xc * xc, axis=-1, keepdims=True)
    y = xc * jax.lax.rsqrt(var + eps) * g_ref[...].astype(jnp.float32) \
        + b_ref[...].astype(jnp.float32)
    o_ref[...] = y.astype(o_ref.dtype)


def layernorm(x, g, b, residual=None, eps=1e-12, out_dtype=jnp.bfloat16):
    M, H = x.shape
    tm = _pick_tile(M, (1024, 512, 256, 128, 64, 32, 16, 8))
    grid = (M // tm,)

    row_spec = pl.BlockSpec((tm, H), lambda i: (i, 0))
    vec_spec = pl.BlockSpec((1, H), lambda i: (0, 0))

    inputs = [x]
    in_specs = [row_spec]
    if residual is not None:
        inputs.append(residual)
        in_specs.append(row_spec)
    inputs += [g.astype(jnp.float32).reshape(1, H), b.astype(jnp.float32).reshape(1, H)]
    in_specs += [vec_spec, vec_spec]

    return pl.pallas_call(
        functools.partial(_layernorm_kernel, eps=eps,
                          has_residual=residual is not None),
        out_shape=jax.ShapeDtypeStruct((M, H), out_dtype),
        grid=grid,
        in_specs=in_specs,
        out_specs=row_spec,
        compiler_params=pltpu.CompilerParams(dimension_semantics=("parallel",)),
    )(*inputs)


# ------------------------- attention (fused QKV slab, per-head in-kernel) -------------------------

def _attention_kernel(qkv_ref, mbias_ref, o_ref, *, n_heads, hidden, head_dim, scale):
    # qkv_ref: (S, 3H) bf16, mbias_ref: (1, S) f32, o_ref: (S, H) bf16
    mbias = mbias_ref[...]
    for h in range(n_heads):  # unrolled; n_heads is small and static
        q = qkv_ref[:, h * head_dim:(h + 1) * head_dim]
        k = qkv_ref[:, hidden + h * head_dim: hidden + (h + 1) * head_dim]
        v = qkv_ref[:, 2 * hidden + h * head_dim: 2 * hidden + (h + 1) * head_dim]
        # scores: contract on head_dim of both operands (no explicit transpose of K)
        s = jax.lax.dot_general(q, k, (((1,), (1,)), ((), ())),
                                preferred_element_type=jnp.float32) * scale
        s = s + mbias                      # (S, S) + (1, S) broadcast over query rows
        m = jnp.max(s, axis=-1, keepdims=True)
        p = jnp.exp(s - m)
        denom = jnp.sum(p, axis=-1, keepdims=True)
        p = p * pl.reciprocal(denom, approx=True)
        ctx = jax.lax.dot_general(p.astype(qkv_ref.dtype), v,
                                  (((1,), (0,)), ((), ())),
                                  preferred_element_type=jnp.float32)
        o_ref[:, h * head_dim:(h + 1) * head_dim] = ctx.astype(o_ref.dtype)
    # TODO(synk): for long sequences this materializes per-head (S, S) scores in VMEM;
    # a flash-style (tq, tk) online-softmax tiling is needed for S >> 512.


def attention(qkv, mask_bias, *, n_heads, hidden):
    # qkv: (B, S, 3H) bf16 (fused Q|K|V projection); mask_bias: (B, 1, S) f32
    B, S, H3 = qkv.shape
    head_dim = hidden // n_heads
    scale = 1.0 / math.sqrt(head_dim)

    cost = pl.CostEstimate(
        flops=4 * B * n_heads * S * S * head_dim,
        transcendentals=B * n_heads * S * S,
        bytes_accessed=int(2 * B * S * H3 + 4 * B * S + 2 * B * S * hidden),
    )

    return pl.pallas_call(
        functools.partial(_attention_kernel, n_heads=n_heads, hidden=hidden,
                          head_dim=head_dim, scale=scale),
        grid=(B,),
        in_specs=[
            pl.BlockSpec((None, S, H3), lambda b: (b, 0, 0)),
            pl.BlockSpec((None, 1, S), lambda b: (b, 0, 0)),
        ],
        out_specs=pl.BlockSpec((None, S, hidden), lambda b: (b, 0, 0)),
        out_shape=jax.ShapeDtypeStruct((B, S, hidden), jnp.bfloat16),
        compiler_params=pltpu.CompilerParams(dimension_semantics=("parallel",)),
        cost_estimate=cost,
    )(qkv.astype(jnp.bfloat16), mask_bias.astype(jnp.float32))


# ------------------------- Parameter init (deterministic, synthetic) -------------------------

def init_params(key, vocab_size, max_pos, type_vocab, hidden, n_layers,
                intermediate, n_classes):
    keys = iter(jax.random.split(key, 8 * n_layers + 16))

    def nrm(shape, std=0.02, dtype=jnp.bfloat16):
        return (jax.random.normal(next(keys), shape, jnp.float32) * std).astype(dtype)

    params = dict(
        word_emb=nrm((vocab_size, hidden), dtype=jnp.float32),
        pos_emb=nrm((max_pos, hidden), dtype=jnp.float32),
        type_emb=nrm((type_vocab, hidden), dtype=jnp.float32),
        emb_ln_g=jnp.ones((hidden,), jnp.float32),
        emb_ln_b=jnp.zeros((hidden,), jnp.float32),
        layers=[],
        pooler_w=nrm((hidden, hidden)),
        pooler_b=jnp.zeros((hidden,), jnp.float32),
        out_w=nrm((hidden, n_classes)),       # self.out = nn.Linear(hidden, n_classes)
        out_b=jnp.zeros((n_classes,), jnp.float32),
    )
    for _ in range(n_layers):
        params["layers"].append(dict(
            w_qkv=nrm((hidden, 3 * hidden)),                 # fused [Wq | Wk | Wv]
            b_qkv=jnp.zeros((3 * hidden,), jnp.float32),
            wo=nrm((hidden, hidden)), bo=jnp.zeros((hidden,), jnp.float32),
            ln1_g=jnp.ones((hidden,), jnp.float32), ln1_b=jnp.zeros((hidden,), jnp.float32),
            wi=nrm((hidden, intermediate)), bi=jnp.zeros((intermediate,), jnp.float32),
            wf=nrm((intermediate, hidden)), bf=jnp.zeros((hidden,), jnp.float32),
            ln2_g=jnp.ones((hidden,), jnp.float32), ln2_b=jnp.zeros((hidden,), jnp.float32),
        ))
    return params


# ------------------------- Forward pass (glue in JAX, hot paths in Pallas) -------------------------

def sentiment_classifier_forward(params, input_ids, attention_mask, *, n_heads):
    B, S = input_ids.shape
    H = params["word_emb"].shape[1]

    # BERT embeddings (gather is XLA glue; LayerNorm is a Pallas kernel)
    # TODO(synk): token_type_ids are not an input of the PyTorch module; segment 0 is assumed.
    emb = (params["word_emb"][input_ids]
           + params["pos_emb"][jnp.arange(S)][None, :, :]
           + params["type_emb"][0][None, None, :])
    h = layernorm(emb.reshape(B * S, H), params["emb_ln_g"], params["emb_ln_b"])

    # extended attention mask: (1 - mask) * -10000, added to attention scores
    mask_bias = (1.0 - attention_mask.astype(jnp.float32)) * -10000.0
    mask_bias = mask_bias[:, None, :]                     # (B, 1, S)

    for lp in params["layers"]:
        # fused Q/K/V projection -> (B, S, 3H) slab, consumed directly by attention
        qkv = dense(h, lp["w_qkv"], lp["b_qkv"]).reshape(B, S, 3 * H)
        ctx = attention(qkv, mask_bias, n_heads=n_heads, hidden=H)   # (B, S, H)
        attn_out = dense(ctx.reshape(B * S, H), lp["wo"], lp["bo"])

        h1 = layernorm(attn_out, lp["ln1_g"], lp["ln1_b"], residual=h)   # LN(attn_out + h)

        inter = dense(h1, lp["wi"], lp["bi"], activation="gelu")
        ffn_out = dense(inter, lp["wf"], lp["bf"])
        h = layernorm(ffn_out, lp["ln2_g"], lp["ln2_b"], residual=h1)    # LN(ffn_out + h1)

    hidden = h.reshape(B, S, H)
    cls = hidden[:, 0, :]                                  # [CLS] token
    pooled = dense(cls, params["pooler_w"], params["pooler_b"], activation="tanh")

    # TODO(synk): nn.Dropout(p=0.3) is identity at inference/eval; stochastic drop not implemented.
    logits = dense(pooled, params["out_w"], params["out_b"], out_dtype=jnp.float32)
    return logits


# ------------------------- Example run -------------------------

if __name__ == "__main__":
    key = jax.random.PRNGKey(0)
    B, S, H, NH, NL, INTER, NC = 2, 8, 32, 2, 2, 64, 3
    VOCAB, MAXPOS, TYPES = 30, 16, 2

    pkey, ikey = jax.random.split(key)
    params = init_params(pkey, VOCAB, MAXPOS, TYPES, H, NL, INTER, NC)

    input_ids = jax.random.randint(ikey, (B, S), 0, VOCAB, dtype=jnp.int32)
    attention_mask = jnp.array([[1, 1, 1, 1, 1, 1, 1, 1],
                                [1, 1, 1, 1, 1, 1, 0, 0]], dtype=jnp.int32)

    fwd = jax.jit(functools.partial(sentiment_classifier_forward, n_heads=NH))
    logits = fwd(params, input_ids, attention_mask)
    jax.block_until_ready(logits)
    assert logits.shape == (B, NC) and logits.dtype == jnp.float32
    print("KERNEL_OK")
</pallas_src>

<mosaic_0001>
module attributes {stable_mosaic.version = 11 : i64} {
  func.func @_layernorm_kernel(%arg0: i32, %arg1: memref<16x32xf32, #tpu.memory_space<vmem>>, %arg2: memref<1x32xf32, #tpu.memory_space<vmem>>, %arg3: memref<1x32xf32, #tpu.memory_space<vmem>>, %arg4: memref<16x32xbf16, #tpu.memory_space<vmem>>) attributes {dimension_semantics = [#tpu.dimension_semantics<parallel>], iteration_bounds = array<i64: 1>, scalar_prefetch = 0 : i64, scratch_operands = 0 : i64, tpu.core_type = #tpu.core_type<tc>, window_params = [{transform_indices = @transform_0, window_bounds = array<i64: 16, 32>}, {pipeline_mode = #tpu.pipeline_mode<synchronous>, transform_indices = @transform_1, window_bounds = array<i64: 1, 32>}, {pipeline_mode = #tpu.pipeline_mode<synchronous>, transform_indices = @transform_2, window_bounds = array<i64: 1, 32>}, {transform_indices = @transform_3, window_bounds = array<i64: 16, 32>}]} {
    %c0 = arith.constant 0 : index
    %c0_0 = arith.constant 0 : index
    %0 = vector.load %arg1[%c0, %c0_0] : memref<16x32xf32, #tpu.memory_space<vmem>>, vector<16x32xf32>
    %cst = arith.constant dense<0.000000e+00> : vector<16xf32>
    %1 = vector.multi_reduction <add>, %0, %cst [1] : vector<16x32xf32> to vector<16xf32>
    %2 = vector.shape_cast %1 : vector<16xf32> to vector<16x1xf32>
    %cst_1 = arith.constant 3.200000e+01 : f32
    %3 = vector.broadcast %cst_1 : f32 to vector<16x1xf32>
    %4 = arith.divf %2, %3 : vector<16x1xf32>
    %5 = vector.broadcast %4 : vector<16x1xf32> to vector<16x32xf32>
    %6 = arith.subf %0, %5 : vector<16x32xf32>
    %7 = arith.mulf %6, %6 : vector<16x32xf32>
    %cst_2 = arith.constant dense<0.000000e+00> : vector<16xf32>
    %8 = vector.multi_reduction <add>, %7, %cst_2 [1] : vector<16x32xf32> to vector<16xf32>
    %9 = vector.shape_cast %8 : vector<16xf32> to vector<16x1xf32>
    %cst_3 = arith.constant 3.200000e+01 : f32
    %10 = vector.broadcast %cst_3 : f32 to vector<16x1xf32>
    %11 = arith.divf %9, %10 : vector<16x1xf32>
    %cst_4 = arith.constant 9.99999996E-13 : f32
    %12 = vector.broadcast %cst_4 : f32 to vector<16x1xf32>
    %13 = arith.addf %11, %12 : vector<16x1xf32>
    %14 = math.rsqrt %13 : vector<16x1xf32>
    %15 = vector.broadcast %14 : vector<16x1xf32> to vector<16x32xf32>
    %16 = arith.mulf %6, %15 : vector<16x32xf32>
    %c0_5 = arith.constant 0 : index
    %c0_6 = arith.constant 0 : index
    %17 = vector.load %arg2[%c0_5, %c0_6] : memref<1x32xf32, #tpu.memory_space<vmem>>, vector<1x32xf32>
    %18 = vector.broadcast %17 : vector<1x32xf32> to vector<16x32xf32>
    %19 = arith.mulf %16, %18 : vector<16x32xf32>
    %c0_7 = arith.constant 0 : index
    %c0_8 = arith.constant 0 : index
    %20 = vector.load %arg3[%c0_7, %c0_8] : memref<1x32xf32, #tpu.memory_space<vmem>>, vector<1x32xf32>
    %21 = vector.broadcast %20 : vector<1x32xf32> to vector<16x32xf32>
    %22 = arith.addf %19, %21 : vector<16x32xf32>
    %23 = arith.truncf %22 : vector<16x32xf32> to vector<16x32xbf16>
    %c0_9 = arith.constant 0 : index
    %c0_10 = arith.constant 0 : index
    %24 = vector.load %arg4[%c0_9, %c0_10] : memref<16x32xbf16, #tpu.memory_space<vmem>>, vector<16x32xbf16>
    tpu.vector_store %arg4[%c0_9, %c0_10], %23 {strides = array<i32>} : memref<16x32xbf16, #tpu.memory_space<vmem>>, vector<16x32xbf16>,
    return
  }
  func.func @transform_0(%arg0: i32) -> (i32, i32) {
    %c0_i32 = arith.constant 0 : i32
    %c0_i32_0 = arith.constant 0 : i32
    return %arg0, %c0_i32 : i32, i32
  }
  func.func @transform_1(%arg0: i32) -> (i32, i32) {
    %c0_i32 = arith.constant 0 : i32
    %c0_i32_0 = arith.constant 0 : i32
    %c0_i32_1 = arith.constant 0 : i32
    return %c0_i32, %c0_i32_0 : i32, i32
  }
  func.func @transform_2(%arg0: i32) -> (i32, i32) {
    %c0_i32 = arith.constant 0 : i32
    %c0_i32_0 = arith.constant 0 : i32
    %c0_i32_1 = arith.constant 0 : i32
    return %c0_i32, %c0_i32_0 : i32, i32
  }
  func.func @transform_3(%arg0: i32) -> (i32, i32) {
    %c0_i32 = arith.constant 0 : i32
    %c0_i32_0 = arith.constant 0 : i32
    return %arg0, %c0_i32 : i32, i32
  }
}

module attributes {stable_mosaic.version = 11 : i64} {
  func.func @_attention_kernel(%arg0: i32, %arg1: memref<1x8x96xbf16, #tpu.memory_space<vmem>>, %arg2: memref<1x1x8xf32, #tpu.memory_space<vmem>>, %arg3: memref<1x8x32xbf16, #tpu.memory_space<vmem>>) attributes {dimension_semantics = [#tpu.dimension_semantics<parallel>], iteration_bounds = array<i64: 2>, scalar_prefetch = 0 : i64, scratch_operands = 0 : i64, tpu.core_type = #tpu.core_type<tc>, window_params = [{transform_indices = @transform_0, window_bounds = array<i64: 1, 8, 96>}, {transform_indices = @transform_1, window_bounds = array<i64: 1, 1, 8>}, {transform_indices = @transform_2, window_bounds = array<i64: 1, 8, 32>}]} {
    %c0 = arith.constant 0 : index
    %c0_0 = arith.constant 0 : index
    %c0_1 = arith.constant 0 : index
    %0 = vector.load %arg2[%c0, %c0_0, %c0_1] : memref<1x1x8xf32, #tpu.memory_space<vmem>>, vector<1x1x8xf32>
    %1 = vector.shape_cast %0 : vector<1x1x8xf32> to vector<1x8xf32>
    %c0_2 = arith.constant 0 : index
    %c0_3 = arith.constant 0 : index
    %c0_4 = arith.constant 0 : index
    %2 = vector.load %arg1[%c0_2, %c0_3, %c0_4] : memref<1x8x96xbf16, #tpu.memory_space<vmem>>, vector<1x8x16xbf16>
    %3 = vector.shape_cast %2 : vector<1x8x16xbf16> to vector<8x16xbf16>
    %c0_5 = arith.constant 0 : index
    %c0_6 = arith.constant 0 : index
    %c32 = arith.constant 32 : index
    %4 = vector.load %arg1[%c0_5, %c0_6, %c32] : memref<1x8x96xbf16, #tpu.memory_space<vmem>>, vector<1x8x16xbf16>
    %5 = vector.shape_cast %4 : vector<1x8x16xbf16> to vector<8x16xbf16>
    %c0_7 = arith.constant 0 : index
    %c0_8 = arith.constant 0 : index
    %c64 = arith.constant 64 : index
    %6 = vector.load %arg1[%c0_7, %c0_8, %c64] : memref<1x8x96xbf16, #tpu.memory_space<vmem>>, vector<1x8x16xbf16>
    %7 = vector.shape_cast %6 : vector<1x8x16xbf16> to vector<8x16xbf16>
    %cst = arith.constant dense<0.000000e+00> : vector<8x8xf32>
    %8 = tpu.matmul %3, %5, %cst {dimension_numbers = #tpu.dot_dimension_numbers<[1], [1], [0], [0], [0, 0, 1, 0], [], []>} : vector<8x16xbf16>, vector<8x16xbf16>, vector<8x8xf32> -> vector<8x8xf32>
    %cst_9 = arith.constant 2.500000e-01 : f32
    %9 = vector.broadcast %cst_9 : f32 to vector<8x8xf32>
    %10 = arith.mulf %8, %9 : vector<8x8xf32>
    %11 = vector.broadcast %1 : vector<1x8xf32> to vector<8x8xf32>
    %12 = arith.addf %10, %11 : vector<8x8xf32>
    %cst_10 = arith.constant dense<0xFF800000> : vector<8xf32>
    %13 = vector.multi_reduction <maximumf>, %12, %cst_10 [1] : vector<8x8xf32> to vector<8xf32>
    %14 = vector.shape_cast %13 : vector<8xf32> to vector<8x1xf32>
    %15 = vector.broadcast %14 : vector<8x1xf32> to vector<8x8xf32>
    %16 = arith.subf %12, %15 : vector<8x8xf32>
    %17 = math.exp %16 : vector<8x8xf32>
    %cst_11 = arith.constant dense<0.000000e+00> : vector<8xf32>
    %18 = vector.multi_reduction <add>, %17, %cst_11 [1] : vector<8x8xf32> to vector<8xf32>
    %19 = vector.shape_cast %18 : vector<8xf32> to vector<8x1xf32>
    %20 = tpu.reciprocal %19 {approx = true} : vector<8x1xf32> -> vector<8x1xf32>
    %21 = vector.broadcast %20 : vector<8x1xf32> to vector<8x8xf32>
    %22 = arith.mulf %17, %21 : vector<8x8xf32>
    %23 = arith.truncf %22 : vector<8x8xf32> to vector<8x8xbf16>
    %cst_12 = arith.constant dense<0.000000e+00> : vector<8x16xf32>
    %24 = tpu.matmul %23, %7, %cst_12 {dimension_numbers = #tpu.dot_dimension_numbers<[1], [0], [0], [1], [0, 0, 1, 1], [], []>} : vector<8x8xbf16>, vector<8x16xbf16>, vector<8x16xf32> -> vector<8x16xf32>
    %25 = arith.truncf %24 : vector<8x16xf32> to vector<8x16xbf16>
    %c0_13 = arith.constant 0 : index
    %c0_14 = arith.constant 0 : index
    %c0_15 = arith.constant 0 : index
    %26 = vector.load %arg3[%c0_13, %c0_14, %c0_15] : memref<1x8x32xbf16, #tpu.memory_space<vmem>>, vector<1x8x16xbf16>
    %27 = vector.shape_cast %26 : vector<1x8x16xbf16> to vector<8x16xbf16>
    %28 = vector.shape_cast %25 : vector<8x16xbf16> to vector<1x8x16xbf16>
    tpu.vector_store %arg3[%c0_13, %c0_14, %c0_15], %28 {strides = array<i32>} : memref<1x8x32xbf16, #tpu.memory_space<vmem>>, vector<1x8x16xbf16>,
    %c0_16 = arith.constant 0 : index
    %c0_17 = arith.constant 0 : index
    %c16 = arith.constant 16 : index
    %29 = vector.load %arg1[%c0_16, %c0_17, %c16] : memref<1x8x96xbf16, #tpu.memory_space<vmem>>, vector<1x8x16xbf16>
    %30 = vector.shape_cast %29 : vector<1x8x16xbf16> to vector<8x16xbf16>
    %c0_18 = arith.constant 0 : index
    %c0_19 = arith.constant 0 : index
    %c48 = arith.constant 48 : index
    %31 = vector.load %arg1[%c0_18, %c0_19, %c48] : memref<1x8x96xbf16, #tpu.memory_space<vmem>>, vector<1x8x16xbf16>
    %32 = vector.shape_cast %31 : vector<1x8x16xbf16> to vector<8x16xbf16>
    %c0_20 = arith.constant 0 : index
    %c0_21 = arith.constant 0 : index
    %c80 = arith.constant 80 : index
    %33 = vector.load %arg1[%c0_20, %c0_21, %c80] : memref<1x8x96xbf16, #tpu.memory_space<vmem>>, vector<1x8x16xbf16>
    %34 = vector.shape_cast %33 : vector<1x8x16xbf16> to vector<8x16xbf16>
    %cst_22 = arith.constant dense<0.000000e+00> : vector<8x8xf32>
    %35 = tpu.matmul %30, %32, %cst_22 {dimension_numbers = #tpu.dot_dimension_numbers<[1], [1], [0], [0], [0, 0, 1, 0], [], []>} : vector<8x16xbf16>, vector<8x16xbf16>, vector<8x8xf32> -> vector<8x8xf32>
    %cst_23 = arith.constant 2.500000e-01 : f32
    %36 = vector.broadcast %cst_23 : f32 to vector<8x8xf32>
    %37 = arith.mulf %35, %36 : vector<8x8xf32>
    %38 = vector.broadcast %1 : vector<1x8xf32> to vector<8x8xf32>
    %39 = arith.addf %37, %38 : vector<8x8xf32>
    %cst_24 = arith.constant dense<0xFF800000> : vector<8xf32>
    %40 = vector.multi_reduction <maximumf>, %39, %cst_24 [1] : vector<8x8xf32> to vector<8xf32>
    %41 = vector.shape_cast %40 : vector<8xf32> to vector<8x1xf32>
    %42 = vector.broadcast %41 : vector<8x1xf32> to vector<8x8xf32>
    %43 = arith.subf %39, %42 : vector<8x8xf32>
    %44 = math.exp %43 : vector<8x8xf32>
    %cst_25 = arith.constant dense<0.000000e+00> : vector<8xf32>
    %45 = vector.multi_reduction <add>, %44, %cst_25 [1] : vector<8x8xf32> to vector<8xf32>
    %46 = vector.shape_cast %45 : vector<8xf32> to vector<8x1xf32>
    %47 = tpu.reciprocal %46 {approx = true} : vector<8x1xf32> -> vector<8x1xf32>
    %48 = vector.broadcast %47 : vector<8x1xf32> to vector<8x8xf32>
    %49 = arith.mulf %44, %48 : vector<8x8xf32>
    %50 = arith.truncf %49 : vector<8x8xf32> to vector<8x8xbf16>
    %cst_26 = arith.constant dense<0.000000e+00> : vector<8x16xf32>
    %51 = tpu.matmul %50, %34, %cst_26 {dimension_numbers = #tpu.dot_dimension_numbers<[1], [0], [0], [1], [0, 0, 1, 1], [], []>} : vector<8x8xbf16>, vector<8x16xbf16>, vector<8x16xf32> -> vector<8x16xf32>
    %52 = arith.truncf %51 : vector<8x16xf32> to vector<8x16xbf16>
    %c0_27 = arith.constant 0 : index
    %c0_28 = arith.constant 0 : index
    %c16_29 = arith.constant 16 : index
    %53 = vector.load %arg3[%c0_27, %c0_28, %c16_29] : memref<1x8x32xbf16, #tpu.memory_space<vmem>>, vector<1x8x16xbf16>
    %54 = vector.shape_cast %53 : vector<1x8x16xbf16> to vector<8x16xbf16>
    %55 = vector.shape_cast %52 : vector<8x16xbf16> to vector<1x8x16xbf16>
    tpu.vector_store %arg3[%c0_27, %c0_28, %c16_29], %55 {strides = array<i32>} : memref<1x8x32xbf16, #tpu.memory_space<vmem>>, vector<1x8x16xbf16>,
    return
  }
  func.func @transform_0(%arg0: i32) -> (i32, i32, i32) {
    %c0_i32 = arith.constant 0 : i32
    %c0_i32_0 = arith.constant 0 : i32
    %c0_i32_1 = arith.constant 0 : i32
    return %arg0, %c0_i32, %c0_i32_0 : i32, i32, i32
  }
  func.func @transform_1(%arg0: i32) -> (i32, i32, i32) {
    %c0_i32 = arith.constant 0 : i32
    %c0_i32_0 = arith.constant 0 : i32
    %c0_i32_1 = arith.constant 0 : i32
    return %arg0, %c0_i32, %c0_i32_0 : i32, i32, i32
  }
  func.func @transform_2(%arg0: i32) -> (i32, i32, i32) {
    %c0_i32 = arith.constant 0 : i32
    %c0_i32_0 = arith.constant 0 : i32
    %c0_i32_1 = arith.constant 0 : i32
    return %arg0, %c0_i32, %c0_i32_0 : i32, i32, i32
  }
}

module attributes {stable_mosaic.version = 11 : i64} {
  func.func @_dense_kernel(%arg0: i32, %arg1: i32, %arg2: i32, %arg3: memref<16x32xbf16, #tpu.memory_space<vmem>>, %arg4: memref<32x96xbf16, #tpu.memory_space<vmem>>, %arg5: memref<1x96xf32, #tpu.memory_space<vmem>>, %arg6: memref<16x96xbf16, #tpu.memory_space<vmem>>, %arg7: memref<16x96xf32, #tpu.memory_space<vmem>>) attributes {dimension_semantics = [#tpu.dimension_semantics<parallel>, #tpu.dimension_semantics<parallel>, #tpu.dimension_semantics<arbitrary>], iteration_bounds = array<i64: 1, 1, 1>, scalar_prefetch = 0 : i64, scratch_operands = 1 : i64, tpu.core_type = #tpu.core_type<tc>, window_params = [{transform_indices = @transform_0, window_bounds = array<i64: 16, 32>}, {transform_indices = @transform_1, window_bounds = array<i64: 32, 96>}, {transform_indices = @transform_2, window_bounds = array<i64: 1, 96>}, {transform_indices = @transform_3, window_bounds = array<i64: 16, 96>}]} {
    %c0_i32 = arith.constant 0 : i32
    %0 = arith.cmpi eq, %arg2, %c0_i32 : i32
    %1 = arith.extui %0 : i1 to i32
    %c0_i32_0 = arith.constant 0 : i32
    %2 = arith.cmpi ne, %1, %c0_i32_0 : i32
    scf.if %2 {
      %cst_10 = arith.constant 0.000000e+00 : f32
      %12 = vector.broadcast %cst_10 : f32 to vector<16x96xf32>
      %c0_11 = arith.constant 0 : index
      %c0_12 = arith.constant 0 : index
      %13 = vector.load %arg7[%c0_11, %c0_12] : memref<16x96xf32, #tpu.memory_space<vmem>>, vector<16x96xf32>
      tpu.vector_store %arg7[%c0_11, %c0_12], %12 {strides = array<i32>} : memref<16x96xf32, #tpu.memory_space<vmem>>, vector<16x96xf32>,
    } else {
    }
    %c0 = arith.constant 0 : index
    %c0_1 = arith.constant 0 : index
    %3 = vector.load %arg7[%c0, %c0_1] : memref<16x96xf32, #tpu.memory_space<vmem>>, vector<16x96xf32>
    %c0_2 = arith.constant 0 : index
    %c0_3 = arith.constant 0 : index
    %4 = vector.load %arg3[%c0_2, %c0_3] : memref<16x32xbf16, #tpu.memory_space<vmem>>, vector<16x32xbf16>
    %c0_4 = arith.constant 0 : index
    %c0_5 = arith.constant 0 : index
    %5 = vector.load %arg4[%c0_4, %c0_5] : memref<32x96xbf16, #tpu.memory_space<vmem>>, vector<32x96xbf16>
    %cst = arith.constant dense<0.000000e+00> : vector<16x96xf32>
    %6 = tpu.matmul %4, %5, %cst {dimension_numbers = #tpu.dot_dimension_numbers<[1], [0], [0], [1], [0, 0, 1, 1], [], []>} : vector<16x32xbf16>, vector<32x96xbf16>, vector<16x96xf32> -> vector<16x96xf32>
    %7 = arith.addf %3, %6 : vector<16x96xf32>
    %c0_6 = arith.constant 0 : index
    %c0_7 = arith.constant 0 : index
    %8 = vector.load %arg7[%c0_6, %c0_7] : memref<16x96xf32, #tpu.memory_space<vmem>>, vector<16x96xf32>
    tpu.vector_store %arg7[%c0_6, %c0_7], %7 {strides = array<i32>} : memref<16x96xf32, #tpu.memory_space<vmem>>, vector<16x96xf32>,
    %c0_i32_8 = arith.constant 0 : i32
    %9 = arith.cmpi eq, %arg2, %c0_i32_8 : i32
    %10 = arith.extui %9 : i1 to i32
    %c0_i32_9 = arith.constant 0 : i32
    %11 = arith.cmpi ne, %10, %c0_i32_9 : i32
    scf.if %11 {
      %c0_10 = arith.constant 0 : index
      %c0_11 = arith.constant 0 : index
      %12 = vector.load %arg7[%c0_10, %c0_11] : memref<16x96xf32, #tpu.memory_space<vmem>>, vector<16x96xf32>
      %c0_12 = arith.constant 0 : index
      %c0_13 = arith.constant 0 : index
      %13 = vector.load %arg5[%c0_12, %c0_13] : memref<1x96xf32, #tpu.memory_space<vmem>>, vector<1x96xf32>
      %14 = vector.broadcast %13 : vector<1x96xf32> to vector<16x96xf32>
      %15 = arith.addf %12, %14 : vector<16x96xf32>
      %16 = arith.truncf %15 : vector<16x96xf32> to vector<16x96xbf16>
      %c0_14 = arith.constant 0 : index
      %c0_15 = arith.constant 0 : index
      %17 = vector.load %arg6[%c0_14, %c0_15] : memref<16x96xbf16, #tpu.memory_space<vmem>>, vector<16x96xbf16>
      tpu.vector_store %arg6[%c0_14, %c0_15], %16 {strides = array<i32>} : memref<16x96xbf16, #tpu.memory_space<vmem>>, vector<16x96xbf16>,
    } else {
    }
    return
  }
  func.func @transform_0(%arg0: i32, %arg1: i32, %arg2: i32) -> (i32, i32) {
    %c0_i32 = arith.constant 0 : i32
    return %arg0, %arg2 : i32, i32
  }
  func.func @transform_1(%arg0: i32, %arg1: i32, %arg2: i32) -> (i32, i32) {
    %c0_i32 = arith.constant 0 : i32
    return %arg2, %arg1 : i32, i32
  }
  func.func @transform_2(%arg0: i32, %arg1: i32, %arg2: i32) -> (i32, i32) {
    %c0_i32 = arith.constant 0 : i32
    %c0_i32_0 = arith.constant 0 : i32
    return %c0_i32, %arg1 : i32, i32
  }
  func.func @transform_3(%arg0: i32, %arg1: i32, %arg2: i32) -> (i32, i32) {
    %c0_i32 = arith.constant 0 : i32
    return %arg0, %arg1 : i32, i32
  }
}

module attributes {stable_mosaic.version = 11 : i64} {
  func.func @_dense_kernel(%arg0: i32, %arg1: i32, %arg2: i32, %arg3: memref<16x32xbf16, #tpu.memory_space<vmem>>, %arg4: memref<32x32xbf16, #tpu.memory_space<vmem>>, %arg5: memref<1x32xf32, #tpu.memory_space<vmem>>, %arg6: memref<16x32xbf16, #tpu.memory_space<vmem>>, %arg7: memref<16x32xf32, #tpu.memory_space<vmem>>) attributes {dimension_semantics = [#tpu.dimension_semantics<parallel>, #tpu.dimension_semantics<parallel>, #tpu.dimension_semantics<arbitrary>], iteration_bounds = array<i64: 1, 1, 1>, scalar_prefetch = 0 : i64, scratch_operands = 1 : i64, tpu.core_type = #tpu.core_type<tc>, window_params = [{transform_indices = @transform_0, window_bounds = array<i64: 16, 32>}, {transform_indices = @transform_1, window_bounds = array<i64: 32, 32>}, {transform_indices = @transform_2, window_bounds = array<i64: 1, 32>}, {transform_indices = @transform_3, window_bounds = array<i64: 16, 32>}]} {
    %c0_i32 = arith.constant 0 : i32
    %0 = arith.cmpi eq, %arg2, %c0_i32 : i32
    %1 = arith.extui %0 : i1 to i32
    %c0_i32_0 = arith.constant 0 : i32
    %2 = arith.cmpi ne, %1, %c0_i32_0 : i32
    scf.if %2 {
      %cst_10 = arith.constant 0.000000e+00 : f32
      %12 = vector.broadcast %cst_10 : f32 to vector<16x32xf32>
      %c0_11 = arith.constant 0 : index
      %c0_12 = arith.constant 0 : index
      %13 = vector.load %arg7[%c0_11, %c0_12] : memref<16x32xf32, #tpu.memory_space<vmem>>, vector<16x32xf32>
      tpu.vector_store %arg7[%c0_11, %c0_12], %12 {strides = array<i32>} : memref<16x32xf32, #tpu.memory_space<vmem>>, vector<16x32xf32>,
    } else {
    }
    %c0 = arith.constant 0 : index
    %c0_1 = arith.constant 0 : index
    %3 = vector.load %arg7[%c0, %c0_1] : memref<16x32xf32, #tpu.memory_space<vmem>>, vector<16x32xf32>
    %c0_2 = arith.constant 0 : index
    %c0_3 = arith.constant 0 : index
    %4 = vector.load %arg3[%c0_2, %c0_3] : memref<16x32xbf16, #tpu.memory_space<vmem>>, vector<16x32xbf16>
    %c0_4 = arith.constant 0 : index
    %c0_5 = arith.constant 0 : index
    %5 = vector.load %arg4[%c0_4, %c0_5] : memref<32x32xbf16, #tpu.memory_space<vmem>>, vector<32x32xbf16>
    %cst = arith.constant dense<0.000000e+00> : vector<16x32xf32>
    %6 = tpu.matmul %4, %5, %cst {dimension_numbers = #tpu.dot_dimension_numbers<[1], [0], [0], [1], [0, 0, 1, 1], [], []>} : vector<16x32xbf16>, vector<32x32xbf16>, vector<16x32xf32> -> vector<16x32xf32>
    %7 = arith.addf %3, %6 : vector<16x32xf32>
    %c0_6 = arith.constant 0 : index
    %c0_7 = arith.constant 0 : index
    %8 = vector.load %arg7[%c0_6, %c0_7] : memref<16x32xf32, #tpu.memory_space<vmem>>, vector<16x32xf32>
    tpu.vector_store %arg7[%c0_6, %c0_7], %7 {strides = array<i32>} : memref<16x32xf32, #tpu.memory_space<vmem>>, vector<16x32xf32>,
    %c0_i32_8 = arith.constant 0 : i32
    %9 = arith.cmpi eq, %arg2, %c0_i32_8 : i32
    %10 = arith.extui %9 : i1 to i32
    %c0_i32_9 = arith.constant 0 : i32
    %11 = arith.cmpi ne, %10, %c0_i32_9 : i32
    scf.if %11 {
      %c0_10 = arith.constant 0 : index
      %c0_11 = arith.constant 0 : index
      %12 = vector.load %arg7[%c0_10, %c0_11] : memref<16x32xf32, #tpu.memory_space<vmem>>, vector<16x32xf32>
      %c0_12 = arith.constant 0 : index
      %c0_13 = arith.constant 0 : index
      %13 = vector.load %arg5[%c0_12, %c0_13] : memref<1x32xf32, #tpu.memory_space<vmem>>, vector<1x32xf32>
      %14 = vector.broadcast %13 : vector<1x32xf32> to vector<16x32xf32>
      %15 = arith.addf %12, %14 : vector<16x32xf32>
      %16 = arith.truncf %15 : vector<16x32xf32> to vector<16x32xbf16>
      %c0_14 = arith.constant 0 : index
      %c0_15 = arith.constant 0 : index
      %17 = vector.load %arg6[%c0_14, %c0_15] : memref<16x32xbf16, #tpu.memory_space<vmem>>, vector<16x32xbf16>
      tpu.vector_store %arg6[%c0_14, %c0_15], %16 {strides = array<i32>} : memref<16x32xbf16, #tpu.memory_space<vmem>>, vector<16x32xbf16>,
    } else {
    }
    return
  }
  func.func @transform_0(%arg0: i32, %arg1: i32, %arg2: i32) -> (i32, i32) {
    %c0_i32 = arith.constant 0 : i32
    return %arg0, %arg2 : i32, i32
  }
  func.func @transform_1(%arg0: i32, %arg1: i32, %arg2: i32) -> (i32, i32) {
    %c0_i32 = arith.constant 0 : i32
    return %arg2, %arg1 : i32, i32
  }
  func.func @transform_2(%arg0: i32, %arg1: i32, %arg2: i32) -> (i32, i32) {
    %c0_i32 = arith.constant 0 : i32
    %c0_i32_0 = arith.constant 0 : i32
    return %c0_i32, %arg1 : i32, i32
  }
  func.func @transform_3(%arg0: i32, %arg1: i32, %arg2: i32) -> (i32, i32) {
    %c0_i32 = arith.constant 0 : i32
    return %arg0, %arg1 : i32, i32
  }
}

module attributes {stable_mosaic.version = 11 : i64} {
  func.func @_layernorm_kernel(%arg0: i32, %arg1: memref<16x32xbf16, #tpu.memory_space<vmem>>, %arg2: memref<16x32xbf16, #tpu.memory_space<vmem>>, %arg3: memref<1x32xf32, #tpu.memory_space<vmem>>, %arg4: memref<1x32xf32, #tpu.memory_space<vmem>>, %arg5: memref<16x32xbf16, #tpu.memory_space<vmem>>) attributes {dimension_semantics = [#tpu.dimension_semantics<parallel>], iteration_bounds = array<i64: 1>, scalar_prefetch = 0 : i64, scratch_operands = 0 : i64, tpu.core_type = #tpu.core_type<tc>, window_params = [{transform_indices = @transform_0, window_bounds = array<i64: 16, 32>}, {transform_indices = @transform_1, window_bounds = array<i64: 16, 32>}, {pipeline_mode = #tpu.pipeline_mode<synchronous>, transform_indices = @transform_2, window_bounds = array<i64: 1, 32>}, {pipeline_mode = #tpu.pipeline_mode<synchronous>, transform_indices = @transform_3, window_bounds = array<i64: 1, 32>}, {transform_indices = @transform_4, window_bounds = array<i64: 16, 32>}]} {
    %c0 = arith.constant 0 : index
    %c0_0 = arith.constant 0 : index
    %0 = vector.load %arg1[%c0, %c0_0] : memref<16x32xbf16, #tpu.memory_space<vmem>>, vector<16x32xbf16>
    %1 = arith.extf %0 : vector<16x32xbf16> to vector<16x32xf32>
    %c0_1 = arith.constant 0 : index
    %c0_2 = arith.constant 0 : index
    %2 = vector.load %arg2[%c0_1, %c0_2] : memref<16x32xbf16, #tpu.memory_space<vmem>>, vector<16x32xbf16>
    %3 = arith.extf %2 : vector<16x32xbf16> to vector<16x32xf32>
    %4 = arith.addf %1, %3 : vector<16x32xf32>
    %cst = arith.constant dense<0.000000e+00> : vector<16xf32>
    %5 = vector.multi_reduction <add>, %4, %cst [1] : vector<16x32xf32> to vector<16xf32>
    %6 = vector.shape_cast %5 : vector<16xf32> to vector<16x1xf32>
    %cst_3 = arith.constant 3.200000e+01 : f32
    %7 = vector.broadcast %cst_3 : f32 to vector<16x1xf32>
    %8 = arith.divf %6, %7 : vector<16x1xf32>
    %9 = vector.broadcast %8 : vector<16x1xf32> to vector<16x32xf32>
    %10 = arith.subf %4, %9 : vector<16x32xf32>
    %11 = arith.mulf %10, %10 : vector<16x32xf32>
    %cst_4 = arith.constant dense<0.000000e+00> : vector<16xf32>
    %12 = vector.multi_reduction <add>, %11, %cst_4 [1] : vector<16x32xf32> to vector<16xf32>
    %13 = vector.shape_cast %12 : vector<16xf32> to vector<16x1xf32>
    %cst_5 = arith.constant 3.200000e+01 : f32
    %14 = vector.broadcast %cst_5 : f32 to vector<16x1xf32>
    %15 = arith.divf %13, %14 : vector<16x1xf32>
    %cst_6 = arith.constant 9.99999996E-13 : f32
    %16 = vector.broadcast %cst_6 : f32 to vector<16x1xf32>
    %17 = arith.addf %15, %16 : vector<16x1xf32>
    %18 = math.rsqrt %17 : vector<16x1xf32>
    %19 = vector.broadcast %18 : vector<16x1xf32> to vector<16x32xf32>
    %20 = arith.mulf %10, %19 : vector<16x32xf32>
    %c0_7 = arith.constant 0 : index
    %c0_8 = arith.constant 0 : index
    %21 = vector.load %arg3[%c0_7, %c0_8] : memref<1x32xf32, #tpu.memory_space<vmem>>, vector<1x32xf32>
    %22 = vector.broadcast %21 : vector<1x32xf32> to vector<16x32xf32>
    %23 = arith.mulf %20, %22 : vector<16x32xf32>
    %c0_9 = arith.constant 0 : index
    %c0_10 = arith.constant 0 : index
    %24 = vector.load %arg4[%c0_9, %c0_10] : memref<1x32xf32, #tpu.memory_space<vmem>>, vector<1x32xf32>
    %25 = vector.broadcast %24 : vector<1x32xf32> to vector<16x32xf32>
    %26 = arith.addf %23, %25 : vector<16x32xf32>
    %27 = arith.truncf %26 : vector<16x32xf32> to vector<16x32xbf16>
    %c0_11 = arith.constant 0 : index
    %c0_12 = arith.constant 0 : index
    %28 = vector.load %arg5[%c0_11, %c0_12] : memref<16x32xbf16, #tpu.memory_space<vmem>>, vector<16x32xbf16>
    tpu.vector_store %arg5[%c0_11, %c0_12], %27 {strides = array<i32>} : memref<16x32xbf16, #tpu.memory_space<vmem>>, vector<16x32xbf16>,
    return
  }
  func.func @transform_0(%arg0: i32) -> (i32, i32) {
    %c0_i32 = arith.constant 0 : i32
    %c0_i32_0 = arith.constant 0 : i32
    return %arg0, %c0_i32 : i32, i32
  }
  func.func @transform_1(%arg0: i32) -> (i32, i32) {
    %c0_i32 = arith.constant 0 : i32
    %c0_i32_0 = arith.constant 0 : i32
    return %arg0, %c0_i32 : i32, i32
  }
  func.func @transform_2(%arg0: i32) -> (i32, i32) {
    %c0_i32 = arith.constant 0 : i32
    %c0_i32_0 = arith.constant 0 : i32
    %c0_i32_1 = arith.constant 0 : i32
    return %c0_i32, %c0_i32_0 : i32, i32
  }
  func.func @transform_3(%arg0: i32) -> (i32, i32) {
    %c0_i32 = arith.constant 0 : i32
    %c0_i32_0 = arith.constant 0 : i32
    %c0_i32_1 = arith.constant 0 : i32
    return %c0_i32, %c0_i32_0 : i32, i32
  }
  func.func @transform_4(%arg0: i32) -> (i32, i32) {
    %c0_i32 = arith.constant 0 : i32
    %c0_i32_0 = arith.constant 0 : i32
    return %arg0, %c0_i32 : i32, i32
  }
}

module attributes {stable_mosaic.version = 11 : i64} {
  func.func @_dense_kernel(%arg0: i32, %arg1: i32, %arg2: i32, %arg3: memref<16x32xbf16, #tpu.memory_space<vmem>>, %arg4: memref<32x64xbf16, #tpu.memory_space<vmem>>, %arg5: memref<1x64xf32, #tpu.memory_space<vmem>>, %arg6: memref<16x64xbf16, #tpu.memory_space<vmem>>, %arg7: memref<16x64xf32, #tpu.memory_space<vmem>>) attributes {dimension_semantics = [#tpu.dimension_semantics<parallel>, #tpu.dimension_semantics<parallel>, #tpu.dimension_semantics<arbitrary>], iteration_bounds = array<i64: 1, 1, 1>, scalar_prefetch = 0 : i64, scratch_operands = 1 : i64, tpu.core_type = #tpu.core_type<tc>, window_params = [{transform_indices = @transform_0, window_bounds = array<i64: 16, 32>}, {transform_indices = @transform_1, window_bounds = array<i64: 32, 64>}, {transform_indices = @transform_2, window_bounds = array<i64: 1, 64>}, {transform_indices = @transform_3, window_bounds = array<i64: 16, 64>}]} {
    %c0_i32 = arith.constant 0 : i32
    %0 = arith.cmpi eq, %arg2, %c0_i32 : i32
    %1 = arith.extui %0 : i1 to i32
    %c0_i32_0 = arith.constant 0 : i32
    %2 = arith.cmpi ne, %1, %c0_i32_0 : i32
    scf.if %2 {
      %cst_10 = arith.constant 0.000000e+00 : f32
      %12 = vector.broadcast %cst_10 : f32 to vector<16x64xf32>
      %c0_11 = arith.constant 0 : index
      %c0_12 = arith.constant 0 : index
      %13 = vector.load %arg7[%c0_11, %c0_12] : memref<16x64xf32, #tpu.memory_space<vmem>>, vector<16x64xf32>
      tpu.vector_store %arg7[%c0_11, %c0_12], %12 {strides = array<i32>} : memref<16x64xf32, #tpu.memory_space<vmem>>, vector<16x64xf32>,
    } else {
    }
    %c0 = arith.constant 0 : index
    %c0_1 = arith.constant 0 : index
    %3 = vector.load %arg7[%c0, %c0_1] : memref<16x64xf32, #tpu.memory_space<vmem>>, vector<16x64xf32>
    %c0_2 = arith.constant 0 : index
    %c0_3 = arith.constant 0 : index
    %4 = vector.load %arg3[%c0_2, %c0_3] : memref<16x32xbf16, #tpu.memory_space<vmem>>, vector<16x32xbf16>
    %c0_4 = arith.constant 0 : index
    %c0_5 = arith.constant 0 : index
    %5 = vector.load %arg4[%c0_4, %c0_5] : memref<32x64xbf16, #tpu.memory_space<vmem>>, vector<32x64xbf16>
    %cst = arith.constant dense<0.000000e+00> : vector<16x64xf32>
    %6 = tpu.matmul %4, %5, %cst {dimension_numbers = #tpu.dot_dimension_numbers<[1], [0], [0], [1], [0, 0, 1, 1], [], []>} : vector<16x32xbf16>, vector<32x64xbf16>, vector<16x64xf32> -> vector<16x64xf32>
    %7 = arith.addf %3, %6 : vector<16x64xf32>
    %c0_6 = arith.constant 0 : index
    %c0_7 = arith.constant 0 : index
    %8 = vector.load %arg7[%c0_6, %c0_7] : memref<16x64xf32, #tpu.memory_space<vmem>>, vector<16x64xf32>
    tpu.vector_store %arg7[%c0_6, %c0_7], %7 {strides = array<i32>} : memref<16x64xf32, #tpu.memory_space<vmem>>, vector<16x64xf32>,
    %c0_i32_8 = arith.constant 0 : i32
    %9 = arith.cmpi eq, %arg2, %c0_i32_8 : i32
    %10 = arith.extui %9 : i1 to i32
    %c0_i32_9 = arith.constant 0 : i32
    %11 = arith.cmpi ne, %10, %c0_i32_9 : i32
    scf.if %11 {
      %c0_10 = arith.constant 0 : index
      %c0_11 = arith.constant 0 : index
      %12 = vector.load %arg7[%c0_10, %c0_11] : memref<16x64xf32, #tpu.memory_space<vmem>>, vector<16x64xf32>
      %c0_12 = arith.constant 0 : index
      %c0_13 = arith.constant 0 : index
      %13 = vector.load %arg5[%c0_12, %c0_13] : memref<1x64xf32, #tpu.memory_space<vmem>>, vector<1x64xf32>
      %14 = vector.broadcast %13 : vector<1x64xf32> to vector<16x64xf32>
      %15 = arith.addf %12, %14 : vector<16x64xf32>
      %cst_14 = arith.constant 5.000000e-01 : f32
      %16 = vector.broadcast %cst_14 : f32 to vector<16x64xf32>
      %17 = arith.mulf %16, %15 : vector<16x64xf32>
      %cst_15 = arith.constant 4.471500e-02 : f32
      %18 = vector.broadcast %cst_15 : f32 to vector<16x64xf32>
      %19 = arith.mulf %18, %15 : vector<16x64xf32>
      %20 = arith.mulf %19, %15 : vector<16x64xf32>
      %21 = arith.mulf %20, %15 : vector<16x64xf32>
      %22 = arith.addf %15, %21 : vector<16x64xf32>
      %cst_16 = arith.constant 0.797884583 : f32
      %23 = vector.broadcast %cst_16 : f32 to vector<16x64xf32>
      %24 = arith.mulf %23, %22 : vector<16x64xf32>
      %25 = math.tanh %24 : vector<16x64xf32>
      %cst_17 = arith.constant 1.000000e+00 : f32
      %26 = vector.broadcast %cst_17 : f32 to vector<16x64xf32>
      %27 = arith.addf %26, %25 : vector<16x64xf32>
      %28 = arith.mulf %17, %27 : vector<16x64xf32>
      %29 = arith.truncf %28 : vector<16x64xf32> to vector<16x64xbf16>
      %c0_18 = arith.constant 0 : index
      %c0_19 = arith.constant 0 : index
      %30 = vector.load %arg6[%c0_18, %c0_19] : memref<16x64xbf16, #tpu.memory_space<vmem>>, vector<16x64xbf16>
      tpu.vector_store %arg6[%c0_18, %c0_19], %29 {strides = array<i32>} : memref<16x64xbf16, #tpu.memory_space<vmem>>, vector<16x64xbf16>,
    } else {
    }
    return
  }
  func.func @transform_0(%arg0: i32, %arg1: i32, %arg2: i32) -> (i32, i32) {
    %c0_i32 = arith.constant 0 : i32
    return %arg0, %arg2 : i32, i32
  }
  func.func @transform_1(%arg0: i32, %arg1: i32, %arg2: i32) -> (i32, i32) {
    %c0_i32 = arith.constant 0 : i32
    return %arg2, %arg1 : i32, i32
  }
  func.func @transform_2(%arg0: i32, %arg1: i32, %arg2: i32) -> (i32, i32) {
    %c0_i32 = arith.constant 0 : i32
    %c0_i32_0 = arith.constant 0 : i32
    return %c0_i32, %arg1 : i32, i32
  }
  func.func @transform_3(%arg0: i32, %arg1: i32, %arg2: i32) -> (i32, i32) {
    %c0_i32 = arith.constant 0 : i32
    return %arg0, %arg1 : i32, i32
  }
}

module attributes {stable_mosaic.version = 11 : i64} {
  func.func @_dense_kernel(%arg0: i32, %arg1: i32, %arg2: i32, %arg3: memref<16x64xbf16, #tpu.memory_space<vmem>>, %arg4: memref<64x32xbf16, #tpu.memory_space<vmem>>, %arg5: memref<1x32xf32, #tpu.memory_space<vmem>>, %arg6: memref<16x32xbf16, #tpu.memory_space<vmem>>, %arg7: memref<16x32xf32, #tpu.memory_space<vmem>>) attributes {dimension_semantics = [#tpu.dimension_semantics<parallel>, #tpu.dimension_semantics<parallel>, #tpu.dimension_semantics<arbitrary>], iteration_bounds = array<i64: 1, 1, 1>, scalar_prefetch = 0 : i64, scratch_operands = 1 : i64, tpu.core_type = #tpu.core_type<tc>, window_params = [{transform_indices = @transform_0, window_bounds = array<i64: 16, 64>}, {transform_indices = @transform_1, window_bounds = array<i64: 64, 32>}, {transform_indices = @transform_2, window_bounds = array<i64: 1, 32>}, {transform_indices = @transform_3, window_bounds = array<i64: 16, 32>}]} {
    %c0_i32 = arith.constant 0 : i32
    %0 = arith.cmpi eq, %arg2, %c0_i32 : i32
    %1 = arith.extui %0 : i1 to i32
    %c0_i32_0 = arith.constant 0 : i32
    %2 = arith.cmpi ne, %1, %c0_i32_0 : i32
    scf.if %2 {
      %cst_10 = arith.constant 0.000000e+00 : f32
      %12 = vector.broadcast %cst_10 : f32 to vector<16x32xf32>
      %c0_11 = arith.constant 0 : index
      %c0_12 = arith.constant 0 : index
      %13 = vector.load %arg7[%c0_11, %c0_12] : memref<16x32xf32, #tpu.memory_space<vmem>>, vector<16x32xf32>
      tpu.vector_store %arg7[%c0_11, %c0_12], %12 {strides = array<i32>} : memref<16x32xf32, #tpu.memory_space<vmem>>, vector<16x32xf32>,
    } else {
    }
    %c0 = arith.constant 0 : index
    %c0_1 = arith.constant 0 : index
    %3 = vector.load %arg7[%c0, %c0_1] : memref<16x32xf32, #tpu.memory_space<vmem>>, vector<16x32xf32>
    %c0_2 = arith.constant 0 : index
    %c0_3 = arith.constant 0 : index
    %4 = vector.load %arg3[%c0_2, %c0_3] : memref<16x64xbf16, #tpu.memory_space<vmem>>, vector<16x64xbf16>
    %c0_4 = arith.constant 0 : index
    %c0_5 = arith.constant 0 : index
    %5 = vector.load %arg4[%c0_4, %c0_5] : memref<64x32xbf16, #tpu.memory_space<vmem>>, vector<64x32xbf16>
    %cst = arith.constant dense<0.000000e+00> : vector<16x32xf32>
    %6 = tpu.matmul %4, %5, %cst {dimension_numbers = #tpu.dot_dimension_numbers<[1], [0], [0], [1], [0, 0, 1, 1], [], []>} : vector<16x64xbf16>, vector<64x32xbf16>, vector<16x32xf32> -> vector<16x32xf32>
    %7 = arith.addf %3, %6 : vector<16x32xf32>
    %c0_6 = arith.constant 0 : index
    %c0_7 = arith.constant 0 : index
    %8 = vector.load %arg7[%c0_6, %c0_7] : memref<16x32xf32, #tpu.memory_space<vmem>>, vector<16x32xf32>
    tpu.vector_store %arg7[%c0_6, %c0_7], %7 {strides = array<i32>} : memref<16x32xf32, #tpu.memory_space<vmem>>, vector<16x32xf32>,
    %c0_i32_8 = arith.constant 0 : i32
    %9 = arith.cmpi eq, %arg2, %c0_i32_8 : i32
    %10 = arith.extui %9 : i1 to i32
    %c0_i32_9 = arith.constant 0 : i32
    %11 = arith.cmpi ne, %10, %c0_i32_9 : i32
    scf.if %11 {
      %c0_10 = arith.constant 0 : index
      %c0_11 = arith.constant 0 : index
      %12 = vector.load %arg7[%c0_10, %c0_11] : memref<16x32xf32, #tpu.memory_space<vmem>>, vector<16x32xf32>
      %c0_12 = arith.constant 0 : index
      %c0_13 = arith.constant 0 : index
      %13 = vector.load %arg5[%c0_12, %c0_13] : memref<1x32xf32, #tpu.memory_space<vmem>>, vector<1x32xf32>
      %14 = vector.broadcast %13 : vector<1x32xf32> to vector<16x32xf32>
      %15 = arith.addf %12, %14 : vector<16x32xf32>
      %16 = arith.truncf %15 : vector<16x32xf32> to vector<16x32xbf16>
      %c0_14 = arith.constant 0 : index
      %c0_15 = arith.constant 0 : index
      %17 = vector.load %arg6[%c0_14, %c0_15] : memref<16x32xbf16, #tpu.memory_space<vmem>>, vector<16x32xbf16>
      tpu.vector_store %arg6[%c0_14, %c0_15], %16 {strides = array<i32>} : memref<16x32xbf16, #tpu.memory_space<vmem>>, vector<16x32xbf16>,
    } else {
    }
    return
  }
  func.func @transform_0(%arg0: i32, %arg1: i32, %arg2: i32) -> (i32, i32) {
    %c0_i32 = arith.constant 0 : i32
    return %arg0, %arg2 : i32, i32
  }
  func.func @transform_1(%arg0: i32, %arg1: i32, %arg2: i32) -> (i32, i32) {
    %c0_i32 = arith.constant 0 : i32
    return %arg2, %arg1 : i32, i32
  }
  func.func @transform_2(%arg0: i32, %arg1: i32, %arg2: i32) -> (i32, i32) {
    %c0_i32 = arith.constant 0 : i32
    %c0_i32_0 = arith.constant 0 : i32
    return %c0_i32, %arg1 : i32, i32
  }
  func.func @transform_3(%arg0: i32, %arg1: i32, %arg2: i32) -> (i32, i32) {
    %c0_i32 = arith.constant 0 : i32
    return %arg0, %arg1 : i32, i32
  }
}

module attributes {stable_mosaic.version = 11 : i64} {
  func.func @_dense_kernel(%arg0: i32, %arg1: i32, %arg2: i32, %arg3: memref<2x32xbf16, #tpu.memory_space<vmem>>, %arg4: memref<32x32xbf16, #tpu.memory_space<vmem>>, %arg5: memref<1x32xf32, #tpu.memory_space<vmem>>, %arg6: memref<2x32xbf16, #tpu.memory_space<vmem>>, %arg7: memref<2x32xf32, #tpu.memory_space<vmem>>) attributes {dimension_semantics = [#tpu.dimension_semantics<parallel>, #tpu.dimension_semantics<parallel>, #tpu.dimension_semantics<arbitrary>], iteration_bounds = array<i64: 1, 1, 1>, scalar_prefetch = 0 : i64, scratch_operands = 1 : i64, tpu.core_type = #tpu.core_type<tc>, window_params = [{transform_indices = @transform_0, window_bounds = array<i64: 2, 32>}, {transform_indices = @transform_1, window_bounds = array<i64: 32, 32>}, {transform_indices = @transform_2, window_bounds = array<i64: 1, 32>}, {transform_indices = @transform_3, window_bounds = array<i64: 2, 32>}]} {
    %c0_i32 = arith.constant 0 : i32
    %0 = arith.cmpi eq, %arg2, %c0_i32 : i32
    %1 = arith.extui %0 : i1 to i32
    %c0_i32_0 = arith.constant 0 : i32
    %2 = arith.cmpi ne, %1, %c0_i32_0 : i32
    scf.if %2 {
      %cst_10 = arith.constant 0.000000e+00 : f32
      %12 = vector.broadcast %cst_10 : f32 to vector<2x32xf32>
      %c0_11 = arith.constant 0 : index
      %c0_12 = arith.constant 0 : index
      %13 = vector.load %arg7[%c0_11, %c0_12] : memref<2x32xf32, #tpu.memory_space<vmem>>, vector<2x32xf32>
      tpu.vector_store %arg7[%c0_11, %c0_12], %12 {strides = array<i32>} : memref<2x32xf32, #tpu.memory_space<vmem>>, vector<2x32xf32>,
    } else {
    }
    %c0 = arith.constant 0 : index
    %c0_1 = arith.constant 0 : index
    %3 = vector.load %arg7[%c0, %c0_1] : memref<2x32xf32, #tpu.memory_space<vmem>>, vector<2x32xf32>
    %c0_2 = arith.constant 0 : index
    %c0_3 = arith.constant 0 : index
    %4 = vector.load %arg3[%c0_2, %c0_3] : memref<2x32xbf16, #tpu.memory_space<vmem>>, vector<2x32xbf16>
    %c0_4 = arith.constant 0 : index
    %c0_5 = arith.constant 0 : index
    %5 = vector.load %arg4[%c0_4, %c0_5] : memref<32x32xbf16, #tpu.memory_space<vmem>>, vector<32x32xbf16>
    %cst = arith.constant dense<0.000000e+00> : vector<2x32xf32>
    %6 = tpu.matmul %4, %5, %cst {dimension_numbers = #tpu.dot_dimension_numbers<[1], [0], [0], [1], [0, 0, 1, 1], [], []>} : vector<2x32xbf16>, vector<32x32xbf16>, vector<2x32xf32> -> vector<2x32xf32>
    %7 = arith.addf %3, %6 : vector<2x32xf32>
    %c0_6 = arith.constant 0 : index
    %c0_7 = arith.constant 0 : index
    %8 = vector.load %arg7[%c0_6, %c0_7] : memref<2x32xf32, #tpu.memory_space<vmem>>, vector<2x32xf32>
    tpu.vector_store %arg7[%c0_6, %c0_7], %7 {strides = array<i32>} : memref<2x32xf32, #tpu.memory_space<vmem>>, vector<2x32xf32>,
    %c0_i32_8 = arith.constant 0 : i32
    %9 = arith.cmpi eq, %arg2, %c0_i32_8 : i32
    %10 = arith.extui %9 : i1 to i32
    %c0_i32_9 = arith.constant 0 : i32
    %11 = arith.cmpi ne, %10, %c0_i32_9 : i32
    scf.if %11 {
      %c0_10 = arith.constant 0 : index
      %c0_11 = arith.constant 0 : index
      %12 = vector.load %arg7[%c0_10, %c0_11] : memref<2x32xf32, #tpu.memory_space<vmem>>, vector<2x32xf32>
      %c0_12 = arith.constant 0 : index
      %c0_13 = arith.constant 0 : index
      %13 = vector.load %arg5[%c0_12, %c0_13] : memref<1x32xf32, #tpu.memory_space<vmem>>, vector<1x32xf32>
      %14 = vector.broadcast %13 : vector<1x32xf32> to vector<2x32xf32>
      %15 = arith.addf %12, %14 : vector<2x32xf32>
      %16 = math.tanh %15 : vector<2x32xf32>
      %17 = arith.truncf %16 : vector<2x32xf32> to vector<2x32xbf16>
      %c0_14 = arith.constant 0 : index
      %c0_15 = arith.constant 0 : index
      %18 = vector.load %arg6[%c0_14, %c0_15] : memref<2x32xbf16, #tpu.memory_space<vmem>>, vector<2x32xbf16>
      tpu.vector_store %arg6[%c0_14, %c0_15], %17 {strides = array<i32>} : memref<2x32xbf16, #tpu.memory_space<vmem>>, vector<2x32xbf16>,
    } else {
    }
    return
  }
  func.func @transform_0(%arg0: i32, %arg1: i32, %arg2: i32) -> (i32, i32) {
    %c0_i32 = arith.constant 0 : i32
    return %arg0, %arg2 : i32, i32
  }
  func.func @transform_1(%arg0: i32, %arg1: i32, %arg2: i32) -> (i32, i32) {
    %c0_i32 = arith.constant 0 : i32
    return %arg2, %arg1 : i32, i32
  }
  func.func @transform_2(%arg0: i32, %arg1: i32, %arg2: i32) -> (i32, i32) {
    %c0_i32 = arith.constant 0 : i32
    %c0_i32_0 = arith.constant 0 : i32
    return %c0_i32, %arg1 : i32, i32
  }
  func.func @transform_3(%arg0: i32, %arg1: i32, %arg2: i32) -> (i32, i32) {
    %c0_i32 = arith.constant 0 : i32
    return %arg0, %arg1 : i32, i32
  }
}

module attributes {stable_mosaic.version = 11 : i64} {
  func.func @_dense_kernel(%arg0: i32, %arg1: i32, %arg2: i32, %arg3: memref<2x32xbf16, #tpu.memory_space<vmem>>, %arg4: memref<32x3xbf16, #tpu.memory_space<vmem>>, %arg5: memref<1x3xf32, #tpu.memory_space<vmem>>, %arg6: memref<2x3xf32, #tpu.memory_space<vmem>>, %arg7: memref<2x3xf32, #tpu.memory_space<vmem>>) attributes {dimension_semantics = [#tpu.dimension_semantics<parallel>, #tpu.dimension_semantics<parallel>, #tpu.dimension_semantics<arbitrary>], iteration_bounds = array<i64: 1, 1, 1>, scalar_prefetch = 0 : i64, scratch_operands = 1 : i64, tpu.core_type = #tpu.core_type<tc>, window_params = [{transform_indices = @transform_0, window_bounds = array<i64: 2, 32>}, {transform_indices = @transform_1, window_bounds = array<i64: 32, 3>}, {transform_indices = @transform_2, window_bounds = array<i64: 1, 3>}, {transform_indices = @transform_3, window_bounds = array<i64: 2, 3>}]} {
    %c0_i32 = arith.constant 0 : i32
    %0 = arith.cmpi eq, %arg2, %c0_i32 : i32
    %1 = arith.extui %0 : i1 to i32
    %c0_i32_0 = arith.constant 0 : i32
    %2 = arith.cmpi ne, %1, %c0_i32_0 : i32
    scf.if %2 {
      %cst_10 = arith.constant 0.000000e+00 : f32
      %12 = vector.broadcast %cst_10 : f32 to vector<2x3xf32>
      %c0_11 = arith.constant 0 : index
      %c0_12 = arith.constant 0 : index
      %13 = vector.load %arg7[%c0_11, %c0_12] : memref<2x3xf32, #tpu.memory_space<vmem>>, vector<2x3xf32>
      tpu.vector_store %arg7[%c0_11, %c0_12], %12 {strides = array<i32>} : memref<2x3xf32, #tpu.memory_space<vmem>>, vector<2x3xf32>,
    } else {
    }
    %c0 = arith.constant 0 : index
    %c0_1 = arith.constant 0 : index
    %3 = vector.load %arg7[%c0, %c0_1] : memref<2x3xf32, #tpu.memory_space<vmem>>, vector<2x3xf32>
    %c0_2 = arith.constant 0 : index
    %c0_3 = arith.constant 0 : index
    %4 = vector.load %arg3[%c0_2, %c0_3] : memref<2x32xbf16, #tpu.memory_space<vmem>>, vector<2x32xbf16>
    %c0_4 = arith.constant 0 : index
    %c0_5 = arith.constant 0 : index
    %5 = vector.load %arg4[%c0_4, %c0_5] : memref<32x3xbf16, #tpu.memory_space<vmem>>, vector<32x3xbf16>
    %cst = arith.constant dense<0.000000e+00> : vector<2x3xf32>
    %6 = tpu.matmul %4, %5, %cst {dimension_numbers = #tpu.dot_dimension_numbers<[1], [0], [0], [1], [0, 0, 1, 1], [], []>} : vector<2x32xbf16>, vector<32x3xbf16>, vector<2x3xf32> -> vector<2x3xf32>
    %7 = arith.addf %3, %6 : vector<2x3xf32>
    %c0_6 = arith.constant 0 : index
    %c0_7 = arith.constant 0 : index
    %8 = vector.load %arg7[%c0_6, %c0_7] : memref<2x3xf32, #tpu.memory_space<vmem>>, vector<2x3xf32>
    tpu.vector_store %arg7[%c0_6, %c0_7], %7 {strides = array<i32>} : memref<2x3xf32, #tpu.memory_space<vmem>>, vector<2x3xf32>,
    %c0_i32_8 = arith.constant 0 : i32
    %9 = arith.cmpi eq, %arg2, %c0_i32_8 : i32
    %10 = arith.extui %9 : i1 to i32
    %c0_i32_9 = arith.constant 0 : i32
    %11 = arith.cmpi ne, %10, %c0_i32_9 : i32
    scf.if %11 {
      %c0_10 = arith.constant 0 : index
      %c0_11 = arith.constant 0 : index
      %12 = vector.load %arg7[%c0_10, %c0_11] : memref<2x3xf32, #tpu.memory_space<vmem>>, vector<2x3xf32>
      %c0_12 = arith.constant 0 : index
      %c0_13 = arith.constant 0 : index
      %13 = vector.load %arg5[%c0_12, %c0_13] : memref<1x3xf32, #tpu.memory_space<vmem>>, vector<1x3xf32>
      %14 = vector.broadcast %13 : vector<1x3xf32> to vector<2x3xf32>
      %15 = arith.addf %12, %14 : vector<2x3xf32>
      %c0_14 = arith.constant 0 : index
      %c0_15 = arith.constant 0 : index
      %16 = vector.load %arg6[%c0_14, %c0_15] : memref<2x3xf32, #tpu.memory_space<vmem>>, vector<2x3xf32>
      tpu.vector_store %arg6[%c0_14, %c0_15], %15 {strides = array<i32>} : memref<2x3xf32, #tpu.memory_space<vmem>>, vector<2x3xf32>,
    } else {
    }
    return
  }
  func.func @transform_0(%arg0: i32, %arg1: i32, %arg2: i32) -> (i32, i32) {
    %c0_i32 = arith.constant 0 : i32
    return %arg0, %arg2 : i32, i32
  }
  func.func @transform_1(%arg0: i32, %arg1: i32, %arg2: i32) -> (i32, i32) {
    %c0_i32 = arith.constant 0 : i32
    return %arg2, %arg1 : i32, i32
  }
  func.func @transform_2(%arg0: i32, %arg1: i32, %arg2: i32) -> (i32, i32) {
    %c0_i32 = arith.constant 0 : i32
    %c0_i32_0 = arith.constant 0 : i32
    return %c0_i32, %arg1 : i32, i32
  }
  func.func @transform_3(%arg0: i32, %arg1: i32, %arg2: i32) -> (i32, i32) {
    %c0_i32 = arith.constant 0 : i32
    return %arg0, %arg1 : i32, i32
  }
}

</mosaic_0001>

<llo_original>
// kernel: sentiment_classifier_forward.20
$region0: #{sentiment_classifier_forward.20}
  #allocation0 [shape = 'u32[]', space=smem, size = 0x4, offset = 0x4, fixed_abs, tag = 'smem constant byte address 0x4 - core index']
  #allocation1 [shape = 'u32[144,128]{1,0:T(1,128)}', space=vmem, size = 0x12000, scoped, tag = 'internal scratch']
  #allocation2 [shape = 'f32[16,32]{1,0:T(8,128)}', space=vmem, size = 0x2000, scoped, tag = 'scratch operand']
  %s0 = inlined_call_operand.vmem [shape: bf16[16,32], index: 0, kind: input, shape index: {}]
  %s1 = inlined_call_operand.vmem [shape: bf16[32,32], index: 1, kind: input, shape index: {}]
  %s2 = inlined_call_operand.vmem [shape: f32[1,32], index: 2, kind: input, shape index: {}]
  %s3 = inlined_call_operand.vmem [shape: bf16[16,32], index: 3, kind: output, shape index: {}]
  %s4 = sld [smem:[#allocation0]]
  $region30: #{sentiment_classifier_forward.20} parent=0
    _
  %s6 = ssub.s32 1, %s4
  %s7 = scalar_select 0, %s6, %s4
  // Predicated region
  $region2: #{sentiment_classifier_forward.20} parent=0 // pred_check
    _
  $region3: #{sentiment_classifier_forward.20} parent=0 // pred_check_branch
    %9 = sbr.rel (0) target = $region5
  $region4: #{sentiment_classifier_forward.20} parent=0 // pred_region
    _
  $region5: #{sentiment_classifier_forward.20} parent=0 // pred_fallthru
    _
  // Predicated region
  $region6: #{sentiment_classifier_forward.20} parent=0 // pred_check
    _
  $region7: #{sentiment_classifier_forward.20} parent=0 // pred_check_branch
    %11 = sbr.rel (0) target = $region9
  $region8: #{sentiment_classifier_forward.20} parent=0 // pred_region
    _
  $region9: #{sentiment_classifier_forward.20} parent=0 // pred_fallthru
    _
  // Predicated region
  $region10: #{sentiment_classifier_forward.20} parent=0 // pred_check
    _
  $region11: #{sentiment_classifier_forward.20} parent=0 // pred_check_branch
    %13 = sbr.rel (0) target = $region13
  $region12: #{sentiment_classifier_forward.20} parent=0 // pred_region
    _
  $region13: #{sentiment_classifier_forward.20} parent=0 // pred_fallthru
    _
  %p15 = scmp.eq.s32.totalorder 0, 0
  // Predicated region
  $region14: #{sentiment_classifier_forward.20} parent=0 // pred_check
    %p16 = pneg %p15
  $region15: #{sentiment_classifier_forward.20} parent=0 // pred_check_branch
    %18 = sbr.rel (%p16) target = $region17
  $region16: #{sentiment_classifier_forward.20} parent=0 // pred_region
    %vm19 = vcmask 261120
    %20 = vst.msk [vmem:[#allocation2] sm:$0xff] %vm19, 0.0
    %21 = vst.msk [vmem:[#allocation2 + $0x8] sm:$0xff] %vm19, 0.0
  $region17: #{sentiment_classifier_forward.20} parent=0 // pred_fallthru
    _
  %v22 = vld [vmem:[#allocation2] sm:$0xff]
  %v23 = vld [vmem:[#allocation2 + $0x8] sm:$0xff]
  %v24 = vld [vmem:[%s0] sm:$0xf]
  %v25 = vld [vmem:[%s0 + $0x4] sm:$0xf]
  %v26 = vld [vmem:[%s1] sm:$0xf]
  %v27 = vld [vmem:[%s1 + $0x4] sm:$0xf]
  %v28 = vld [vmem:[%s1 + $0x8] sm:$0xf]
  %v29 = vld [vmem:[%s1 + $0xc] sm:$0xf]
  %v32 = vunpack.c.l.b16 %v24
  %v33 = vunpack.c.l.b16 %v25
  %v34 = vpack.c.b16 %v33, %v32
  %v39 = vunpack.c.l.b16 %v26
  %v40 = vunpack.c.l.b16 %v27
  %v41 = vunpack.c.l.b16 %v28
  %v42 = vunpack.c.l.b16 %v29
  %v43 = vpack.c.b16 %v40, %v39
  %v44 = vpack.c.b16 %v42, %v41
  %vm47 = vcmask 261120
  %v49 = vsel %vm47, %v34, 0
  %51 = vmatprep.subr.bf16.mxu0 0
  %52 = vmatpush1.bf16.msra.mxu0 0
  %53 = vmatprep.subr.bf16.mxu0 0
  %54 = vmatpush1.bf16.msra.mxu0 0
  %55 = vmatprep.subr.bf16.mxu0 0
  %56 = vmatpush1.bf16.msra.mxu0 0
  %57 = vmatprep.subr.bf16.mxu0 0
  %58 = vmatpush1.bf16.msra.mxu0 0
  %59 = vmatprep.subr.bf16.mxu0 0
  %60 = vmatpush1.bf16.msra.mxu0 0
  %61 = vmatprep.subr.bf16.mxu0 0
  %62 = vmatpush1.bf16.msra.mxu0 0
  %63 = vmatprep.subr.bf16.mxu0 0
  %64 = vmatpush1.bf16.msra.mxu0 %v44
  %65 = vmatprep.subr.bf16.mxu0 0
  %66 = vmatpush1.bf16.msra.mxu0 %v43
  %67 = vmatprep.subr.bf16.mxu0 0
  %68 = vmatpush2.bf16.msra.mxu0 0
  %69 = vmatprep.subr.bf16.mxu0 0
  %70 = vmatpush2.bf16.msra.mxu0 0
  %71 = vmatprep.subr.bf16.mxu0 0
  %72 = vmatpush2.bf16.msra.mxu0 0
  %73 = vmatprep.subr.bf16.mxu0 0
  %74 = vmatpush2.bf16.msra.mxu0 0
  %75 = vmatprep.subr.bf16.mxu0 0
  %76 = vmatpush2.bf16.msra.mxu0 0
  %77 = vmatprep.subr.bf16.mxu0 0
  %78 = vmatpush2.bf16.msra.mxu0 0
  %79 = vmatprep.subr.bf16.mxu0 0
  %80 = vmatpush2.bf16.msra.mxu0 0
  %81 = vmatprep.subr.bf16.mxu0 0
  %82 = vmatpush2.bf16.msra.mxu0 0
  %83 = vmatprep.mubr.bf16.mxu0 0
  %84 = vmatmul.mubr.bf16.gmra.mxu0 %v49
  %v85 = vpop.f32.mrf.mxu0
  %v86 = vadd.f32 0.0, %v85
  %v87 = vpop.f32.mrf.mxu0
  %v88 = vpop.f32.mrf.mxu0
  %v89 = vadd.f32 0.0, %v88
  %v90 = vpop.f32.mrf.mxu0
  %91 = vdwg.mxu0
  %v92 = vadd.f32 %v22, %v86
  %v93 = vadd.f32 %v23, %v89
  %94 = vst.msk [vmem:[#allocation2] sm:$0xff] %vm47, %v92
  %95 = vst.msk [vmem:[#allocation2 + $0x8] sm:$0xff] %vm47, %v93
  // Predicated region
  $region18: #{sentiment_classifier_forward.20} parent=0 // pred_check
    %p96 = pneg %p15
  $region19: #{sentiment_classifier_forward.20} parent=0 // pred_check_branch
    %98 = sbr.rel (%p96) target = $region21
  $region20: #{sentiment_classifier_forward.20} parent=0 // pred_region
    %v99 = vld [vmem:[#allocation2] sm:$0xff]
    %v100 = vld [vmem:[#allocation2 + $0x8] sm:$0xff]
    %v101 = vld [vmem:[%s2] sm:$0x1]
    %v103 = vlaneseq
    %v104 = vshrl.u32 %v103, 7
    %v105 = vsub.s32 0, %v104
    %v106 = vrot.slane %v101, %v105
    %v108 = vadd.f32 %v99, %v106
    %v109 = vadd.f32 %v100, %v106
    %v110 = vpack.c.bf16 %v109, %v108
    %v112 = vunpack.c.l.b16 %v110
    %v113 = vunpack.c.h.b16 %v110
    %v114 = vpack.c.b16 %v112, %v112
    %v115 = vpack.c.b16 %v113, %v113
    %vm118 = vcmask 257024
    %119 = vst.msk [vmem:[%s3] sm:$0xf] %vm118, %v114
    %120 = vst.msk [vmem:[%s3 + $0x4] sm:$0xf] %vm118, %v115
  $region21: #{sentiment_classifier_forward.20} parent=0 // pred_fallthru
    _
  // Predicated region
  $region22: #{sentiment_classifier_forward.20} parent=0 // pred_check
    _
  $region23: #{sentiment_classifier_forward.20} parent=0 // pred_check_branch
    %122 = sbr.rel (0) target = $region25
  $region24: #{sentiment_classifier_forward.20} parent=0 // pred_region
    _
  $region25: #{sentiment_classifier_forward.20} parent=0 // pred_fallthru
    _
  // Predicated region
  $region26: #{sentiment_classifier_forward.20} parent=0 // pred_check
    _
  $region27: #{sentiment_classifier_forward.20} parent=0 // pred_check_branch
    %124 = sbr.rel (0) target = $region29
  $region28: #{sentiment_classifier_forward.20} parent=0 // pred_region
    _
  $region29: #{sentiment_classifier_forward.20} parent=0 // pred_fallthru
    _

// kernel: sentiment_classifier_forward.17
$region0: #{sentiment_classifier_forward.17}
  #allocation0 [shape = 'u32[]', space=smem, size = 0x4, offset = 0x4, fixed_abs, tag = 'smem constant byte address 0x4 - core index']
  #allocation1 [shape = 'u32[144,128]{1,0:T(1,128)}', space=vmem, size = 0x12000, scoped, tag = 'internal scratch']
  %s0 = inlined_call_operand.vmem [shape: f32[16,32], index: 0, kind: input, shape index: {}]
  %s1 = inlined_call_operand.vmem [shape: f32[1,32], index: 1, kind: input, shape index: {}]
  %s2 = inlined_call_operand.vmem [shape: f32[1,32], index: 2, kind: input, shape index: {}]
  %s3 = inlined_call_operand.vmem [shape: bf16[16,32], index: 3, kind: output, shape index: {}]
  %s4 = sld [smem:[#allocation0]]
  $region22: #{sentiment_classifier_forward.17} parent=0
    _
  %s6 = ssub.s32 1, %s4
  %s7 = scalar_select 0, %s6, %s4
  // Predicated region
  $region2: #{sentiment_classifier_forward.17} parent=0 // pred_check
    _
  $region3: #{sentiment_classifier_forward.17} parent=0 // pred_check_branch
    %9 = sbr.rel (0) target = $region5
  $region4: #{sentiment_classifier_forward.17} parent=0 // pred_region
    _
  $region5: #{sentiment_classifier_forward.17} parent=0 // pred_fallthru
    _
  // Predicated region
  $region6: #{sentiment_classifier_forward.17} parent=0 // pred_check
    _
  $region7: #{sentiment_classifier_forward.17} parent=0 // pred_check_branch
    %11 = sbr.rel (0) target = $region9
  $region8: #{sentiment_classifier_forward.17} parent=0 // pred_region
    _
  $region9: #{sentiment_classifier_forward.17} parent=0 // pred_fallthru
    _
  // Predicated region
  $region10: #{sentiment_classifier_forward.17} parent=0 // pred_check
    _
  $region11: #{sentiment_classifier_forward.17} parent=0 // pred_check_branch
    %13 = sbr.rel (0) target = $region13
  $region12: #{sentiment_classifier_forward.17} parent=0 // pred_region
    _
  $region13: #{sentiment_classifier_forward.17} parent=0 // pred_fallthru
    _
  %v14 = vld [vmem:[%s0] sm:$0xff]
  %v15 = vld [vmem:[%s0 + $0x8] sm:$0xff]
  %vm16 = vcmask 261120
  %v17 = vsel %vm16, %v14, 0.0
  %18 = vadd.xlane.f32.xlu0 %v17
  %v19 = vpop.xlane.xlu0 %18
  %v20 = vsel %vm16, %v15, 0.0
  %21 = vadd.xlane.f32.xlu0 %v20
  %v22 = vpop.xlane.xlu0 %21
  %v23 = vrcp.pop 32.0
  %v24 = vmul.f32 %v19, %v23
  %v25 = vmul.f32 %v22, %v23
  %v26 = vsub.f32 %v14, %v24
  %v27 = vsub.f32 %v15, %v25
  %v28 = vmul.f32 %v26, %v26
  %v29 = vmul.f32 %v27, %v27
  %v30 = vsel %vm16, %v28, 0.0
  %31 = vadd.xlane.f32.xlu0 %v30
  %v32 = vpop.xlane.xlu0 %31
  %v33 = vsel %vm16, %v29, 0.0
  %34 = vadd.xlane.f32.xlu0 %v33
  %v35 = vpop.xlane.xlu0 %34
  %v36 = vmul.f32 %v32, %v23
  %v37 = vmul.f32 %v35, %v23
  %v38 = vadd.f32 %v36, 1e-12
  %v39 = vadd.f32 %v37, 1e-12
  %v40 = vrsqrt.pop %v38
  %v41 = vrsqrt.pop %v39
  %v42 = vmul.f32 %v26, %v40
  %v43 = vmul.f32 %v27, %v41
  %v44 = vld [vmem:[%s1] sm:$0x1]
  %v46 = vlaneseq
  %v47 = vshrl.u32 %v46, 7
  %v48 = vsub.s32 0, %v47
  %v49 = vrot.slane %v44, %v48
  %v51 = vmul.f32 %v42, %v49
  %v52 = vmul.f32 %v43, %v49
  %v53 = vld [vmem:[%s2] sm:$0x1]
  %v55 = vlaneseq
  %v56 = vshrl.u32 %v55, 7
  %v57 = vsub.s32 0, %v56
  %v58 = vrot.slane %v53, %v57
  %v60 = vadd.f32 %v51, %v58
  %v61 = vadd.f32 %v52, %v58
  %v62 = vpack.c.bf16 %v61, %v60
  %v64 = vunpack.c.l.b16 %v62
  %v65 = vunpack.c.h.b16 %v62
  %v66 = vpack.c.b16 %v64, %v64
  %v67 = vpack.c.b16 %v65, %v65
  %vm70 = vcmask 257024
  %71 = vst.msk [vmem:[%s3] sm:$0xf] %vm70, %v66
  %72 = vst.msk [vmem:[%s3 + $0x4] sm:$0xf] %vm70, %v67
  // Predicated region
  $region14: #{sentiment_classifier_forward.17} parent=0 // pred_check
    _
  $region15: #{sentiment_classifier_forward.17} parent=0 // pred_check_branch
    %74 = sbr.rel (0) target = $region17
  $region16: #{sentiment_classifier_forward.17} parent=0 // pred_region
    _
  $region17: #{sentiment_classifier_forward.17} parent=0 // pred_fallthru
    _
  // Predicated region
  $region18: #{sentiment_classifier_forward.17} parent=0 // pred_check
    _
  $region19: #{sentiment_classifier_forward.17} parent=0 // pred_check_branch
    %76 = sbr.rel (0) target = $region21
  $region20: #{sentiment_classifier_forward.17} parent=0 // pred_region
    _
  $region21: #{sentiment_classifier_forward.17} parent=0 // pred_fallthru
    _

// kernel: sentiment_classifier_forward.18
$region0: #{sentiment_classifier_forward.18}
  #allocation0 [shape = 'u32[]', space=smem, size = 0x4, offset = 0x4, fixed_abs, tag = 'smem constant byte address 0x4 - core index']
  #allocation1 [shape = 'u32[144,128]{1,0:T(1,128)}', space=vmem, size = 0x12000, scoped, tag = 'internal scratch']
  #allocation2 [shape = 'f32[16,96]{1,0:T(8,128)}', space=vmem, size = 0x2000, scoped, tag = 'scratch operand']
  %s0 = inlined_call_operand.vmem [shape: bf16[16,32], index: 0, kind: input, shape index: {}]
  %s1 = inlined_call_operand.vmem [shape: bf16[32,96], index: 1, kind: input, shape index: {}]
  %s2 = inlined_call_operand.vmem [shape: f32[1,96], index: 2, kind: input, shape index: {}]
  %s3 = inlined_call_operand.vmem [shape: bf16[16,96], index: 3, kind: output, shape index: {}]
  %s4 = sld [smem:[#allocation0]]
  $region30: #{sentiment_classifier_forward.18} parent=0
    _
  %s6 = ssub.s32 1, %s4
  %s7 = scalar_select 0, %s6, %s4
  // Predicated region
  $region2: #{sentiment_classifier_forward.18} parent=0 // pred_check
    _
  $region3: #{sentiment_classifier_forward.18} parent=0 // pred_check_branch
    %9 = sbr.rel (0) target = $region5
  $region4: #{sentiment_classifier_forward.18} parent=0 // pred_region
    _
  $region5: #{sentiment_classifier_forward.18} parent=0 // pred_fallthru
    _
  // Predicated region
  $region6: #{sentiment_classifier_forward.18} parent=0 // pred_check
    _
  $region7: #{sentiment_classifier_forward.18} parent=0 // pred_check_branch
    %11 = sbr.rel (0) target = $region9
  $region8: #{sentiment_classifier_forward.18} parent=0 // pred_region
    _
  $region9: #{sentiment_classifier_forward.18} parent=0 // pred_fallthru
    _
  // Predicated region
  $region10: #{sentiment_classifier_forward.18} parent=0 // pred_check
    _
  $region11: #{sentiment_classifier_forward.18} parent=0 // pred_check_branch
    %13 = sbr.rel (0) target = $region13
  $region12: #{sentiment_classifier_forward.18} parent=0 // pred_region
    _
  $region13: #{sentiment_classifier_forward.18} parent=0 // pred_fallthru
    _
  %p15 = scmp.eq.s32.totalorder 0, 0
  // Predicated region
  $region14: #{sentiment_classifier_forward.18} parent=0 // pred_check
    %p16 = pneg %p15
  $region15: #{sentiment_classifier_forward.18} parent=0 // pred_check_branch
    %18 = sbr.rel (%p16) target = $region17
  $region16: #{sentiment_classifier_forward.18} parent=0 // pred_region
    %vm19 = vcmask 785408
    %20 = vst.msk [vmem:[#allocation2] sm:$0xff] %vm19, 0.0
    %21 = vst.msk [vmem:[#allocation2 + $0x8] sm:$0xff] %vm19, 0.0
  $region17: #{sentiment_classifier_forward.18} parent=0 // pred_fallthru
    _
  %v22 = vld [vmem:[#allocation2] sm:$0xff]
  %v23 = vld [vmem:[#allocation2 + $0x8] sm:$0xff]
  %v24 = vld [vmem:[%s0] sm:$0xf]
  %v25 = vld [vmem:[%s0 + $0x4] sm:$0xf]
  %v26 = vld [vmem:[%s1] sm:$0xf]
  %v27 = vld [vmem:[%s1 + $0x4] sm:$0xf]
  %v28 = vld [vmem:[%s1 + $0x8] sm:$0xf]
  %v29 = vld [vmem:[%s1 + $0xc] sm:$0xf]
  %v32 = vunpack.c.l.b16 %v24
  %v33 = vunpack.c.l.b16 %v25
  %v34 = vpack.c.b16 %v33, %v32
  %v39 = vunpack.c.l.b16 %v26
  %v40 = vunpack.c.l.b16 %v27
  %v41 = vunpack.c.l.b16 %v28
  %v42 = vunpack.c.l.b16 %v29
  %v43 = vpack.c.b16 %v40, %v39
  %v44 = vpack.c.b16 %v42, %v41
  %vm47 = vcmask 261120
  %v49 = vsel %vm47, %v34, 0
  %51 = vmatprep.subr.bf16.mxu0 0
  %52 = vmatpush1.bf16.msra.mxu0 0
  %53 = vmatprep.subr.bf16.mxu0 0
  %54 = vmatpush1.bf16.msra.mxu0 0
  %55 = vmatprep.subr.bf16.mxu0 0
  %56 = vmatpush1.bf16.msra.mxu0 0
  %57 = vmatprep.subr.bf16.mxu0 0
  %58 = vmatpush1.bf16.msra.mxu0 0
  %59 = vmatprep.subr.bf16.mxu0 0
  %60 = vmatpush1.bf16.msra.mxu0 0
  %61 = vmatprep.subr.bf16.mxu0 0
  %62 = vmatpush1.bf16.msra.mxu0 0
  %63 = vmatprep.subr.bf16.mxu0 0
  %64 = vmatpush1.bf16.msra.mxu0 %v44
  %65 = vmatprep.subr.bf16.mxu0 0
  %66 = vmatpush1.bf16.msra.mxu0 %v43
  %67 = vmatprep.subr.bf16.mxu0 0
  %68 = vmatpush2.bf16.msra.mxu0 0
  %69 = vmatprep.subr.bf16.mxu0 0
  %70 = vmatpush2.bf16.msra.mxu0 0
  %71 = vmatprep.subr.bf16.mxu0 0
  %72 = vmatpush2.bf16.msra.mxu0 0
  %73 = vmatprep.subr.bf16.mxu0 0
  %74 = vmatpush2.bf16.msra.mxu0 0
  %75 = vmatprep.subr.bf16.mxu0 0
  %76 = vmatpush2.bf16.msra.mxu0 0
  %77 = vmatprep.subr.bf16.mxu0 0
  %78 = vmatpush2.bf16.msra.mxu0 0
  %79 = vmatprep.subr.bf16.mxu0 0
  %80 = vmatpush2.bf16.msra.mxu0 0
  %81 = vmatprep.subr.bf16.mxu0 0
  %82 = vmatpush2.bf16.msra.mxu0 0
  %83 = vmatprep.mubr.bf16.mxu0 0
  %84 = vmatmul.mubr.bf16.gmra.mxu0 %v49
  %v85 = vpop.f32.mrf.mxu0
  %v86 = vadd.f32 0.0, %v85
  %v87 = vpop.f32.mrf.mxu0
  %v88 = vpop.f32.mrf.mxu0
  %v89 = vadd.f32 0.0, %v88
  %v90 = vpop.f32.mrf.mxu0
  %91 = vdwg.mxu0
  %v92 = vadd.f32 %v22, %v86
  %v93 = vadd.f32 %v23, %v89
  %vm94 = vcmask 785408
  %95 = vst.msk [vmem:[#allocation2] sm:$0xff] %vm94, %v92
  %96 = vst.msk [vmem:[#allocation2 + $0x8] sm:$0xff] %vm94, %v93
  // Predicated region
  $region18: #{sentiment_classifier_forward.18} parent=0 // pred_check
    %p97 = pneg %p15
  $region19: #{sentiment_classifier_forward.18} parent=0 // pred_check_branch
    %99 = sbr.rel (%p97) target = $region21
  $region20: #{sentiment_classifier_forward.18} parent=0 // pred_region
    %v100 = vld [vmem:[#allocation2] sm:$0xff]
    %v101 = vld [vmem:[#allocation2 + $0x8] sm:$0xff]
    %v102 = vld [vmem:[%s2] sm:$0x1]
    %v104 = vlaneseq
    %v105 = vshrl.u32 %v104, 7
    %v106 = vsub.s32 0, %v105
    %v107 = vrot.slane %v102, %v106
    %v109 = vadd.f32 %v100, %v107
    %v110 = vadd.f32 %v101, %v107
    %v111 = vpack.c.bf16 %v110, %v109
    %v113 = vunpack.c.l.b16 %v111
    %v114 = vunpack.c.h.b16 %v111
    %v115 = vpack.c.b16 %v113, %v113
    %v116 = vpack.c.b16 %v114, %v114
    %vm119 = vcmask 781312
    %120 = vst.msk [vmem:[%s3] sm:$0xf] %vm119, %v115
    %121 = vst.msk [vmem:[%s3 + $0x4] sm:$0xf] %vm119, %v116
  $region21: #{sentiment_classifier_forward.18} parent=0 // pred_fallthru
    _
  // Predicated region
  $region22: #{sentiment_classifier_forward.18} parent=0 // pred_check
    _
  $region23: #{sentiment_classifier_forward.18} parent=0 // pred_check_branch
    %123 = sbr.rel (0) target = $region25
  $region24: #{sentiment_classifier_forward.18} parent=0 // pred_region
    _
  $region25: #{sentiment_classifier_forward.18} parent=0 // pred_fallthru
    _
  // Predicated region
  $region26: #{sentiment_classifier_forward.18} parent=0 // pred_check
    _
  $region27: #{sentiment_classifier_forward.18} parent=0 // pred_check_branch
    %125 = sbr.rel (0) target = $region29
  $region28: #{sentiment_classifier_forward.18} parent=0 // pred_region
    _
  $region29: #{sentiment_classifier_forward.18} parent=0 // pred_fallthru
    _

// kernel: sentiment_classifier_forward.19
$region0: #{sentiment_classifier_forward.19}
  #allocation0 [shape = 'u32[]', space=smem, size = 0x4, offset = 0x4, fixed_abs, tag = 'smem constant byte address 0x4 - core index']
  #allocation1 [shape = 'u32[144,128]{1,0:T(1,128)}', space=vmem, size = 0x12000, scoped, tag = 'internal scratch']
  %s0 = inlined_call_operand.vmem [shape: bf16[2,8,96], index: 0, kind: input, shape index: {}]
  %s1 = inlined_call_operand.vmem [shape: f32[2,1,8], index: 1, kind: input, shape index: {}]
  %s2 = inlined_call_operand.vmem [shape: bf16[2,8,32], index: 2, kind: output, shape index: {}]
  %s3 = sld [smem:[#allocation0]]
  $region41: #{sentiment_classifier_forward.19} parent=0
    _
  %s5 = ssub.s32 1, %s3
  %s6 = scalar_select 0, %s5, %s3
  loop: start=0, step=1, limit=4
  $region2: #{sentiment_classifier_forward.19} parent=0 // loop_pre_header
    _
  $region3: #{sentiment_classifier_forward.19} parent=0 // loop_header
    %s8 = sphi 0, %s12
    %p9 = scmp.ge.s32.totalorder %s8, 4
    %s18 = sphi 0, %s20
    %s21 = sphi 0, %s18
    %s22 = sphi 0, %s21
    %s38 = sphi 0, %s22
    %s44 = sphi 0, %s46
    %s47 = sphi 0, %s44
    %s48 = sphi 0, %s47
    %s64 = sphi 0, %s48
    %s70 = sphi 0, %s72
    %s73 = sphi 0, %s70
    %s74 = sphi 0, %s73
    %s90 = sphi 0, %s74
  $region4: #{sentiment_classifier_forward.19} parent=0 // loop_header_branch
    %11 = sbr.rel (%p9) target = $region8
  $region5: #{sentiment_classifier_forward.19} parent=0 // loop_body
    %s13 = ssub.s32 %s8, 1
    %s14 = ssub.s32 %s8, 2
    %s15 = sadd.s32 %s8, 1
    %s16 = ssub.s32 %s8, %s15
    %p17 = scmp.eq.s32.totalorder %s16, 0
    %s19 = sadd.s32 %s18, 1
    %s20 = scalar_select %p17, %s18, %s19
    %p23 = pneg %p17
    %p24 = scmp.eq.s32.totalorder %s8, 1
    %p25 = por %p23, %p24
    %p26 = scmp.ne.s32.totalorder %s18, %s21
    %p27 = scmp.eq.s32.totalorder %s8, 0
    %p28 = por %p26, %p27
    %p29 = scmp.ne.s32.totalorder %s18, %s21
    %p30 = scmp.eq.s32.totalorder %s13, 1
    %p31 = por %p29, %p30
    %p32 = scmp.ne.s32.totalorder %s21, %s22
    %p33 = scmp.eq.s32.totalorder %s13, 0
    %p34 = por %p32, %p33
    %p35 = scmp.ne.s32.totalorder %s21, %s22
    %p36 = scmp.eq.s32.totalorder %s14, 1
    %p37 = por %p35, %p36
    %p39 = scmp.ne.s32.totalorder %s22, %s38
    %p40 = scmp.eq.s32.totalorder %s14, 0
    %p41 = por %p39, %p40
    %s42 = ssub.s32 %s8, %s15
    %p43 = scmp.eq.s32.totalorder %s42, 0
    %s45 = sadd.s32 %s44, 1
    %s46 = scalar_select %p43, %s44, %s45
    %p49 = pneg %p43
    %p50 = scmp.eq.s32.totalorder %s8, 1
    %p51 = por %p49, %p50
    %p52 = scmp.ne.s32.totalorder %s44, %s47
    %p53 = scmp.eq.s32.totalorder %s8, 0
    %p54 = por %p52, %p53
    %p55 = scmp.ne.s32.totalorder %s44, %s47
    %p56 = scmp.eq.s32.totalorder %s13, 1
    %p57 = por %p55, %p56
    %p58 = scmp.ne.s32.totalorder %s47, %s48
    %p59 = scmp.eq.s32.totalorder %s13, 0
    %p60 = por %p58, %p59
    %p61 = scmp.ne.s32.totalorder %s47, %s48
    %p62 = scmp.eq.s32.totalorder %s14, 1
    %p63 = por %p61, %p62
    %p65 = scmp.ne.s32.totalorder %s48, %s64
    %p66 = scmp.eq.s32.totalorder %s14, 0
    %p67 = por %p65, %p66
    %s68 = ssub.s32 %s8, %s15
    %p69 = scmp.eq.s32.totalorder %s68, 0
    %s71 = sadd.s32 %s70, 1
    %s72 = scalar_select %p69, %s70, %s71
    %p75 = pneg %p69
    %p76 = scmp.eq.s32.totalorder %s8, 1
    %p77 = por %p75, %p76
    %p78 = scmp.ne.s32.totalorder %s70, %s73
    %p79 = scmp.eq.s32.totalorder %s8, 0
    %p80 = por %p78, %p79
    %p81 = scmp.ne.s32.totalorder %s70, %s73
    %p82 = scmp.eq.s32.totalorder %s13, 1
    %p83 = por %p81, %p82
    %p84 = scmp.ne.s32.totalorder %s73, %s74
    %p85 = scmp.eq.s32.totalorder %s13, 0
    %p86 = por %p84, %p85
    %p87 = scmp.ne.s32.totalorder %s73, %s74
    %p88 = scmp.eq.s32.totalorder %s14, 1
    %p89 = por %p87, %p88
    %p91 = scmp.ne.s32.totalorder %s74, %s90
    %p92 = scmp.eq.s32.totalorder %s14, 0
    %p93 = por %p91, %p92
    %p94 = scmp.le.s32.totalorder 1, %s8
    %p95 = scmp.lt.s32.totalorder %s8, 3
    %p96 = pnand %p94, %p95
    %p97 = pneg %p96
    // Predicated region
    $region9: #{sentiment_classifier_forward.19} parent=5 // pred_check
      _
    $region10: #{sentiment_classifier_forward.19} parent=5 // pred_check_branch
      %99 = sbr.rel (%p96) target = $region12
    $region11: #{sentiment_classifier_forward.19} parent=5 // pred_region
      %s100 = ssub.s32 %s8, 1
    $region12: #{sentiment_classifier_forward.19} parent=5 // pred_fallthru
      _
    %p101 = scmp.lt.s32.totalorder %s8, 2
    // Predicated region
    $region13: #{sentiment_classifier_forward.19} parent=5 // pred_check
      %p102 = pneg %p101
    $region14: #{sentiment_classifier_forward.19} parent=5 // pred_check_branch
      %104 = sbr.rel (%p102) target = $region16
    $region15: #{sentiment_classifier_forward.19} parent=5 // pred_region
      // Predicated region
      $region17: #{sentiment_classifier_forward.19} parent=15 // pred_check
        %p105 = pneg %p28
      $region18: #{sentiment_classifier_forward.19} parent=15 // pred_check_branch
        %107 = sbr.rel (%p105) target = $region20
      $region19: #{sentiment_classifier_forward.19} parent=15 // pred_region
        %p108 = scmp.lt.s32.totalorder %s8, 1
        %s109 = scalar_select %p108, %s8, 1
        %s110 = smul.addr %s109, 4
        %s111 = scalar_lea.vmem %s0, %s110
      $region20: #{sentiment_classifier_forward.19} parent=15 // pred_fallthru
        _
      // Predicated region
      $region21: #{sentiment_classifier_forward.19} parent=15 // pred_check
        %p112 = pneg %p54
      $region22: #{sentiment_classifier_forward.19} parent=15 // pred_check_branch
        %114 = sbr.rel (%p112) target = $region24
      $region23: #{sentiment_classifier_forward.19} parent=15 // pred_region
        %p115 = scmp.lt.s32.totalorder %s8, 1
        %s116 = scalar_select %p115, %s8, 1
        %s117 = scalar_lea.vmem %s1, %s116
      $region24: #{sentiment_classifier_forward.19} parent=15 // pred_fallthru
        _
    $region16: #{sentiment_classifier_forward.19} parent=5 // pred_fallthru
      _
    %p118 = scmp.le.s32.totalorder 1, %s8
    %p119 = scmp.lt.s32.totalorder %s8, 3
    %p120 = pnand %p118, %p119
    %p121 = pneg %p120
    // Predicated region
    $region25: #{sentiment_classifier_forward.19} parent=5 // pred_check
      _
    $region26: #{sentiment_classifier_forward.19} parent=5 // pred_check_branch
      %123 = sbr.rel (%p120) target = $region28
    $region27: #{sentiment_classifier_forward.19} parent=5 // pred_region
      %s124 = ssub.s32 %s8, 1
      %p125 = scmp.lt.s32.totalorder %s13, 1
      %s126 = scalar_select %p125, %s13, 1
      %s127 = smul.addr %s126, 4
      %s128 = scalar_lea.vmem %s0, %s127
      %p129 = pneg %p34
      %p130 = pneg %p31
      %p131 = scmp.lt.s32.totalorder %s13, 1
      %s132 = scalar_select %p131, %s13, 1
      %s133 = scalar_lea.vmem %s1, %s132
      %p134 = pneg %p60
      %p135 = pneg %p57
      %p136 = pneg %p86
      %p137 = pneg %p83
      %p138 = scmp.lt.s32.totalorder %s13, 1
      %s139 = scalar_select %p138, %s13, 1
      %s140 = smul.addr %s139, 4
      %s141 = scalar_lea.vmem %s2, %s140
      %p142 = scmp.lt.s32.totalorder %s13, 1
      %s143 = scalar_select %p142, %s13, 1
      %s144 = smul.addr %s143, 4
      %s145 = scalar_lea.vmem %s0, %s144
      %p146 = scmp.lt.s32.totalorder %s13, 1
      %s147 = scalar_select %p146, %s13, 1
      %s148 = scalar_lea.vmem %s1, %s147
      %p149 = scmp.lt.s32.totalorder %s13, 1
      %s150 = scalar_select %p149, %s13, 1
      %s151 = smul.addr %s150, 4
      %s152 = scalar_lea.vmem %s2, %s151
      %v154 = vld [vmem:[%s148] sm:$0x1]
      %v155 = vld [vmem:[%s145] sm:$0xf]
      %v157 = vunpack.c.l.b16 %v155
      %v158 = vpack.c.b16 %v157, %v157
      %159 = vrot.lane.b32.xlu0 %v158, 96
      %v160 = vpop.permute.xlu0 %159
      %vm161 = vcmask 130048
      %v163 = vsel %vm161, %v155, 0
      %v166 = vsel %vm161, %v160, 0
      %168 = vmatprep.subr.bf16.mxu0 0
      %169 = vmatpush1.bf16.xpose.msra.mxu0 0
      %170 = vmatprep.subr.bf16.mxu0 0
      %171 = vmatpush1.bf16.xpose.msra.mxu0 0
      %172 = vmatprep.subr.bf16.mxu0 0
      %173 = vmatpush1.bf16.xpose.msra.mxu0 0
      %174 = vmatprep.subr.bf16.mxu0 0
      %175 = vmatpush1.bf16.xpose.msra.mxu0 0
      %176 = vmatprep.subr.bf16.mxu0 0
      %177 = vmatpush1.bf16.xpose.msra.mxu0 0
      %178 = vmatprep.subr.bf16.mxu0 0
      %179 = vmatpush1.bf16.xpose.msra.mxu0 0
      %180 = vmatprep.subr.bf16.mxu0 0
      %181 = vmatpush1.bf16.xpose.msra.mxu0 0
      %182 = vmatprep.subr.bf16.mxu0 0
      %183 = vmatpush1.bf16.xpose.msra.mxu0 %v166
      %184 = vmatprep.subr.bf16.mxu0 0
      %185 = vmatpush2.bf16.xpose.msra.mxu0 0
      %186 = vmatprep.subr.bf16.mxu0 0
      %187 = vmatpush2.bf16.xpose.msra.mxu0 0
      %188 = vmatprep.subr.bf16.mxu0 0
      %189 = vmatpush2.bf16.xpose.msra.mxu0 0
      %190 = vmatprep.subr.bf16.mxu0 0
      %191 = vmatpush2.bf16.xpose.msra.mxu0 0
      %192 = vmatprep.subr.bf16.mxu0 0
      %193 = vmatpush2.bf16.xpose.msra.mxu0 0
      %194 = vmatprep.subr.bf16.mxu0 0
      %195 = vmatpush2.bf16.xpose.msra.mxu0 0
      %196 = vmatprep.subr.bf16.mxu0 0
      %197 = vmatpush2.bf16.xpose.msra.mxu0 0
      %198 = vmatprep.subr.bf16.mxu0 0
      %199 = vmatpush2.bf16.xpose.msra.mxu0 0
      %200 = vmatprep.mubr.bf16.mxu0 0
      %201 = vmatmul.mubr.bf16.gmra.mxu0 %v163
      %v202 = vpop.f32.mrf.mxu0
      %v203 = vadd.f32 0.0, %v202
      %v204 = vpop.f32.mrf.mxu0
      %v205 = vpop.f32.mrf.mxu0
      %v206 = vpop.f32.mrf.mxu0
      %207 = vdwg.mxu0
      %v208 = vmul.f32 %v203, 0.25
      %v210 = vlaneseq
      %v211 = vshrl.u32 %v210, 7
      %v212 = vsub.s32 0, %v211
      %v213 = vrot.slane %v154, %v212
      %v215 = vadd.f32 %v208, %v213
      %vm216 = vcmask 64512
      %v217 = vsel %vm216, %v215, -inf
      %218 = vmax.xlane.f32.xlu0 %v217
      %v219 = vpop.xlane.xlu0 %218
      %v220 = vsub.f32 %v215, %v219
      %v221 = vmul.f32 %v220, 1.442695
      %v222 = vpow.pop %v221
      %v223 = vsel %vm216, %v222, 0.0
      %224 = vadd.xlane.f32.xlu0 %v223
      %v225 = vpop.xlane.xlu0 %224
      %v226 = vrcp.pop %v225
      %v227 = vmul.f32 %v222, %v226
      %v228 = vpack.c.bf16 %v227, %v227
      %229 = vrot.lane.b32.xlu0 %v158, 64
      %v230 = vpop.permute.xlu0 %229
      %v232 = vsel %vm216, %v228, 0
      %vm234 = vcmask 1043456
      %v236 = vsel %vm234, %v230, 0
      %238 = vmatprep.subr.bf16.mxu0 0
      %239 = vmatpush1.bf16.msra.mxu0 0
      %240 = vmatprep.subr.bf16.mxu0 0
      %241 = vmatpush1.bf16.msra.mxu0 0
      %242 = vmatprep.subr.bf16.mxu0 0
      %243 = vmatpush1.bf16.msra.mxu0 0
      %244 = vmatprep.subr.bf16.mxu0 0
      %245 = vmatpush1.bf16.msra.mxu0 0
      %246 = vmatprep.subr.bf16.mxu0 0
      %247 = vmatpush1.bf16.msra.mxu0 0
      %248 = vmatprep.subr.bf16.mxu0 0
      %249 = vmatpush1.bf16.msra.mxu0 0
      %250 = vmatprep.subr.bf16.mxu0 0
      %251 = vmatpush1.bf16.msra.mxu0 0
      %252 = vmatprep.subr.bf16.mxu0 0
      %253 = vmatpush1.bf16.msra.mxu0 %v236
      %254 = vmatprep.subr.bf16.mxu0 0
      %255 = vmatpush2.bf16.msra.mxu0 0
      %256 = vmatprep.subr.bf16.mxu0 0
      %257 = vmatpush2.bf16.msra.mxu0 0
      %258 = vmatprep.subr.bf16.mxu0 0
      %259 = vmatpush2.bf16.msra.mxu0 0
      %260 = vmatprep.subr.bf16.mxu0 0
      %261 = vmatpush2.bf16.msra.mxu0 0
      %262 = vmatprep.subr.bf16.mxu0 0
      %263 = vmatpush2.bf16.msra.mxu0 0
      %264 = vmatprep.subr.bf16.mxu0 0
      %265 = vmatpush2.bf16.msra.mxu0 0
      %266 = vmatprep.subr.bf16.mxu0 0
      %267 = vmatpush2.bf16.msra.mxu0 0
      %268 = vmatprep.subr.bf16.mxu0 0
      %269 = vmatpush2.bf16.msra.mxu0 0
      %270 = vmatprep.mubr.bf16.mxu0 0
      %271 = vmatmul.mubr.bf16.gmra.mxu0 %v232
      %v272 = vpop.f32.mrf.mxu0
      %v273 = vadd.f32 0.0, %v272
      %v274 = vpop.f32.mrf.mxu0
      %v275 = vpop.f32.mrf.mxu0
      %v276 = vpop.f32.mrf.mxu0
      %277 = vdwg.mxu0
      %v278 = vpack.c.bf16 %v273, %v273
      %vm279 = vcmask 125952
      %280 = vst.msk [vmem:[%s152] sm:$0xf] %vm279, %v278
      %v281 = vld [vmem:[%s145] sm:$0xf]
      %v283 = vunpack.c.l.b16 %v281
      %v284 = vpack.c.b16 %v283, %v283
      %285 = vrot.lane.b32.xlu0 %v284, 112
      %v286 = vpop.permute.xlu0 %285
      %287 = vrot.lane.b32.xlu0 %v284, 80
      %v288 = vpop.permute.xlu0 %287
      %v290 = vsel %vm161, %v286, 0
      %v293 = vsel %vm161, %v288, 0
      %295 = vmatprep.subr.bf16.mxu0 0
      %296 = vmatpush1.bf16.xpose.msra.mxu0 0
      %297 = vmatprep.subr.bf16.mxu0 0
      %298 = vmatpush1.bf16.xpose.msra.mxu0 0
      %299 = vmatprep.subr.bf16.mxu0 0
      %300 = vmatpush1.bf16.xpose.msra.mxu0 0
      %301 = vmatprep.subr.bf16.mxu0 0
      %302 = vmatpush1.bf16.xpose.msra.mxu0 0
      %303 = vmatprep.subr.bf16.mxu0 0
      %304 = vmatpush1.bf16.xpose.msra.mxu0 0
      %305 = vmatprep.subr.bf16.mxu0 0
      %306 = vmatpush1.bf16.xpose.msra.mxu0 0
      %307 = vmatprep.subr.bf16.mxu0 0
      %308 = vmatpush1.bf16.xpose.msra.mxu0 0
      %309 = vmatprep.subr.bf16.mxu0 0
      %310 = vmatpush1.bf16.xpose.msra.mxu0 %v293
      %311 = vmatprep.subr.bf16.mxu0 0
      %312 = vmatpush2.bf16.xpose.msra.mxu0 0
      %313 = vmatprep.subr.bf16.mxu0 0
      %314 = vmatpush2.bf16.xpose.msra.mxu0 0
      %315 = vmatprep.subr.bf16.mxu0 0
      %316 = vmatpush2.bf16.xpose.msra.mxu0 0
      %317 = vmatprep.subr.bf16.mxu0 0
      %318 = vmatpush2.bf16.xpose.msra.mxu0 0
      %319 = vmatprep.subr.bf16.mxu0 0
      %320 = vmatpush2.bf16.xpose.msra.mxu0 0
      %321 = vmatprep.subr.bf16.mxu0 0
      %322 = vmatpush2.bf16.xpose.msra.mxu0 0
      %323 = vmatprep.subr.bf16.mxu0 0
      %324 = vmatpush2.bf16.xpose.msra.mxu0 0
      %325 = vmatprep.subr.bf16.mxu0 0
      %326 = vmatpush2.bf16.xpose.msra.mxu0 0
      %327 = vmatprep.mubr.bf16.mxu0 0
      %328 = vmatmul.mubr.bf16.gmra.mxu0 %v290
      %v329 = vpop.f32.mrf.mxu0
      %v330 = vadd.f32 0.0, %v329
      %v331 = vpop.f32.mrf.mxu0
      %v332 = vpop.f32.mrf.mxu0
      %v333 = vpop.f32.mrf.mxu0
      %334 = vdwg.mxu0
      %v335 = vmul.f32 %v330, 0.25
      %v336 = vadd.f32 %v335, %v213
      %v337 = vsel %vm216, %v336, -inf
      %338 = vmax.xlane.f32.xlu0 %v337
      %v339 = vpop.xlane.xlu0 %338
      %v340 = vsub.f32 %v336, %v339
      %v341 = vmul.f32 %v340, 1.442695
      %v342 = vpow.pop %v341
      %v343 = vsel %vm216, %v342, 0.0
      %344 = vadd.xlane.f32.xlu0 %v343
      %v345 = vpop.xlane.xlu0 %344
      %v346 = vrcp.pop %v345
      %v347 = vmul.f32 %v342, %v346
      %v348 = vpack.c.bf16 %v347, %v347
      %349 = vrot.lane.b32.xlu0 %v284, 48
      %v350 = vpop.permute.xlu0 %349
      %v352 = vsel %vm216, %v348, 0
      %v355 = vsel %vm234, %v350, 0
      %357 = vmatprep.subr.bf16.mxu0 0
      %358 = vmatpush1.bf16.msra.mxu0 0
      %359 = vmatprep.subr.bf16.mxu0 0
      %360 = vmatpush1.bf16.msra.mxu0 0
      %361 = vmatprep.subr.bf16.mxu0 0
      %362 = vmatpush1.bf16.msra.mxu0 0
      %363 = vmatprep.subr.bf16.mxu0 0
      %364 = vmatpush1.bf16.msra.mxu0 0
      %365 = vmatprep.subr.bf16.mxu0 0
      %366 = vmatpush1.bf16.msra.mxu0 0
      %367 = vmatprep.subr.bf16.mxu0 0
      %368 = vmatpush1.bf16.msra.mxu0 0
      %369 = vmatprep.subr.bf16.mxu0 0
      %370 = vmatpush1.bf16.msra.mxu0 0
      %371 = vmatprep.subr.bf16.mxu0 0
      %372 = vmatpush1.bf16.msra.mxu0 %v355
      %373 = vmatprep.subr.bf16.mxu0 0
      %374 = vmatpush2.bf16.msra.mxu0 0
      %375 = vmatprep.subr.bf16.mxu0 0
      %376 = vmatpush2.bf16.msra.mxu0 0
      %377 = vmatprep.subr.bf16.mxu0 0
      %378 = vmatpush2.bf16.msra.mxu0 0
      %379 = vmatprep.subr.bf16.mxu0 0
      %380 = vmatpush2.bf16.msra.mxu0 0
      %381 = vmatprep.subr.bf16.mxu0 0
      %382 = vmatpush2.bf16.msra.mxu0 0
      %383 = vmatprep.subr.bf16.mxu0 0
      %384 = vmatpush2.bf16.msra.mxu0 0
      %385 = vmatprep.subr.bf16.mxu0 0
      %386 = vmatpush2.bf16.msra.mxu0 0
      %387 = vmatprep.subr.bf16.mxu0 0
      %388 = vmatpush2.bf16.msra.mxu0 0
      %389 = vmatprep.mubr.bf16.mxu0 0
      %390 = vmatmul.mubr.bf16.gmra.mxu0 %v352
      %v391 = vpop.f32.mrf.mxu0
      %v392 = vadd.f32 0.0, %v391
      %v393 = vpop.f32.mrf.mxu0
      %v394 = vpop.f32.mrf.mxu0
      %v395 = vpop.f32.mrf.mxu0
      %396 = vdwg.mxu0
      %v397 = vpack.c.bf16 %v392, %v392
      %v399 = vunpack.c.l.b16 %v397
      %v400 = vpack.c.b16 %v399, %v399
      %401 = vrot.lane.b32.xlu0 %v400, 16
      %v402 = vpop.permute.xlu0 %401
      %vm404 = vcmask 257152
      %405 = vst.msk [vmem:[%s152] sm:$0xf] %vm404, %v402
      %p406 = scmp.lt.s32.totalorder %s13, 1
      %s407 = scalar_select %p406, %s13, 1
      %s408 = smul.addr %s407, 4
      %s409 = scalar_lea.vmem %s2, %s408
      // Predicated region
      $region29: #{sentiment_classifier_forward.19} parent=27 // pred_check
        %p410 = pneg %p83
      $region30: #{sentiment_classifier_forward.19} parent=27 // pred_check_branch
        %412 = sbr.rel (%p410) target = $region32
      $region31: #{sentiment_classifier_forward.19} parent=27 // pred_region
        _
      $region32: #{sentiment_classifier_forward.19} parent=27 // pred_fallthru
        _
    $region28: #{sentiment_classifier_forward.19} parent=5 // pred_fallthru
      _
    %p413 = scmp.le.s32.totalorder 2, %s8
    // Predicated region
    $region33: #{sentiment_classifier_forward.19} parent=5 // pred_check
      %p414 = pneg %p413
    $region34: #{sentiment_classifier_forward.19} parent=5 // pred_check_branch
      %416 = sbr.rel (%p414) target = $region36
    $region35: #{sentiment_classifier_forward.19} parent=5 // pred_region
      %s417 = ssub.s32 %s8, 2
      // Predicated region
      $region37: #{sentiment_classifier_forward.19} parent=35 // pred_check
        %p418 = pneg %p89
      $region38: #{sentiment_classifier_forward.19} parent=35 // pred_check_branch
        %420 = sbr.rel (%p418) target = $region40
      $region39: #{sentiment_classifier_forward.19} parent=35 // pred_region
        %p421 = scmp.lt.s32.totalorder %s14, 1
        %s422 = scalar_select %p421, %s14, 1
        %s423 = smul.addr %s422, 4
        %s424 = scalar_lea.vmem %s2, %s423
      $region40: #{sentiment_classifier_forward.19} parent=35 // pred_fallthru
        _
    $region36: #{sentiment_classifier_forward.19} parent=5 // pred_fallthru
      _
  $region6: #{sentiment_classifier_forward.19} parent=0 // loop_footer
    %s12 = sadd.s32 1, %s8
  $region7: #{sentiment_classifier_forward.19} parent=0 // loop_footer_branch
    %7 = sbr.rel target = $region3
  $region8: #{sentiment_classifier_forward.19} parent=0 // loop_exit
    _

// kernel: sentiment_classifier_forward.21
$region0: #{sentiment_classifier_forward.21}
  #allocation0 [shape = 'u32[]', space=smem, size = 0x4, offset = 0x4, fixed_abs, tag = 'smem constant byte address 0x4 - core index']
  #allocation1 [shape = 'u32[144,128]{1,0:T(1,128)}', space=vmem, size = 0x12000, scoped, tag = 'internal scratch']
  %s0 = inlined_call_operand.vmem [shape: bf16[16,32], index: 0, kind: input, shape index: {}]
  %s1 = inlined_call_operand.vmem [shape: bf16[16,32], index: 1, kind: input, shape index: {}]
  %s2 = inlined_call_operand.vmem [shape: f32[1,32], index: 2, kind: input, shape index: {}]
  %s3 = inlined_call_operand.vmem [shape: f32[1,32], index: 3, kind: input, shape index: {}]
  %s4 = inlined_call_operand.vmem [shape: bf16[16,32], index: 4, kind: output, shape index: {}]
  %s5 = sld [smem:[#allocation0]]
  $region26: #{sentiment_classifier_forward.21} parent=0
    _
  %s7 = ssub.s32 1, %s5
  %s8 = scalar_select 0, %s7, %s5
  // Predicated region
  $region2: #{sentiment_classifier_forward.21} parent=0 // pred_check
    _
  $region3: #{sentiment_classifier_forward.21} parent=0 // pred_check_branch
    %10 = sbr.rel (0) target = $region5
  $region4: #{sentiment_classifier_forward.21} parent=0 // pred_region
    _
  $region5: #{sentiment_classifier_forward.21} parent=0 // pred_fallthru
    _
  // Predicated region
  $region6: #{sentiment_classifier_forward.21} parent=0 // pred_check
    _
  $region7: #{sentiment_classifier_forward.21} parent=0 // pred_check_branch
    %12 = sbr.rel (0) target = $region9
  $region8: #{sentiment_classifier_forward.21} parent=0 // pred_region
    _
  $region9: #{sentiment_classifier_forward.21} parent=0 // pred_fallthru
    _
  // Predicated region
  $region10: #{sentiment_classifier_forward.21} parent=0 // pred_check
    _
  $region11: #{sentiment_classifier_forward.21} parent=0 // pred_check_branch
    %14 = sbr.rel (0) target = $region13
  $region12: #{sentiment_classifier_forward.21} parent=0 // pred_region
    _
  $region13: #{sentiment_classifier_forward.21} parent=0 // pred_fallthru
    _
  // Predicated region
  $region14: #{sentiment_classifier_forward.21} parent=0 // pred_check
    _
  $region15: #{sentiment_classifier_forward.21} parent=0 // pred_check_branch
    %16 = sbr.rel (0) target = $region17
  $region16: #{sentiment_classifier_forward.21} parent=0 // pred_region
    _
  $region17: #{sentiment_classifier_forward.21} parent=0 // pred_fallthru
    _
  %v17 = vld [vmem:[%s0] sm:$0xf]
  %v18 = vld [vmem:[%s0 + $0x4] sm:$0xf]
  %v19 = vunpack.c.l.bf16 %v17
  %v20 = vunpack.c.l.bf16 %v18
  %v21 = vld [vmem:[%s1] sm:$0xf]
  %v22 = vld [vmem:[%s1 + $0x4] sm:$0xf]
  %v23 = vunpack.c.l.bf16 %v21
  %v24 = vunpack.c.l.bf16 %v22
  %v25 = vadd.f32 %v19, %v23
  %v26 = vadd.f32 %v20, %v24
  %vm27 = vcmask 261120
  %v28 = vsel %vm27, %v25, 0.0
  %29 = vadd.xlane.f32.xlu0 %v28
  %v30 = vpop.xlane.xlu0 %29
  %v31 = vsel %vm27, %v26, 0.0
  %32 = vadd.xlane.f32.xlu0 %v31
  %v33 = vpop.xlane.xlu0 %32
  %v34 = vrcp.pop 32.0
  %v35 = vmul.f32 %v30, %v34
  %v36 = vmul.f32 %v33, %v34
  %v37 = vsub.f32 %v25, %v35
  %v38 = vsub.f32 %v26, %v36
  %v39 = vmul.f32 %v37, %v37
  %v40 = vmul.f32 %v38, %v38
  %v41 = vsel %vm27, %v39, 0.0
  %42 = vadd.xlane.f32.xlu0 %v41
  %v43 = vpop.xlane.xlu0 %42
  %v44 = vsel %vm27, %v40, 0.0
  %45 = vadd.xlane.f32.xlu0 %v44
  %v46 = vpop.xlane.xlu0 %45
  %v47 = vmul.f32 %v43, %v34
  %v48 = vmul.f32 %v46, %v34
  %v49 = vadd.f32 %v47, 1e-12
  %v50 = vadd.f32 %v48, 1e-12
  %v51 = vrsqrt.pop %v49
  %v52 = vrsqrt.pop %v50
  %v53 = vmul.f32 %v37, %v51
  %v54 = vmul.f32 %v38, %v52
  %v55 = vld [vmem:[%s2] sm:$0x1]
  %v57 = vlaneseq
  %v58 = vshrl.u32 %v57, 7
  %v59 = vsub.s32 0, %v58
  %v60 = vrot.slane %v55, %v59
  %v62 = vmul.f32 %v53, %v60
  %v63 = vmul.f32 %v54, %v60
  %v64 = vld [vmem:[%s3] sm:$0x1]
  %v66 = vlaneseq
  %v67 = vshrl.u32 %v66, 7
  %v68 = vsub.s32 0, %v67
  %v69 = vrot.slane %v64, %v68
  %v71 = vadd.f32 %v62, %v69
  %v72 = vadd.f32 %v63, %v69
  %v73 = vpack.c.bf16 %v72, %v71
  %v75 = vunpack.c.l.b16 %v73
  %v76 = vunpack.c.h.b16 %v73
  %v77 = vpack.c.b16 %v75, %v75
  %v78 = vpack.c.b16 %v76, %v76
  %vm81 = vcmask 257024
  %82 = vst.msk [vmem:[%s4] sm:$0xf] %vm81, %v77
  %83 = vst.msk [vmem:[%s4 + $0x4] sm:$0xf] %vm81, %v78
  // Predicated region
  $region18: #{sentiment_classifier_forward.21} parent=0 // pred_check
    _
  $region19: #{sentiment_classifier_forward.21} parent=0 // pred_check_branch
    %85 = sbr.rel (0) target = $region21
  $region20: #{sentiment_classifier_forward.21} parent=0 // pred_region
    _
  $region21: #{sentiment_classifier_forward.21} parent=0 // pred_fallthru
    _
  // Predicated region
  $region22: #{sentiment_classifier_forward.21} parent=0 // pred_check
    _
  $region23: #{sentiment_classifier_forward.21} parent=0 // pred_check_branch
    %87 = sbr.rel (0) target = $region25
  $region24: #{sentiment_classifier_forward.21} parent=0 // pred_region
    _
  $region25: #{sentiment_classifier_forward.21} parent=0 // pred_fallthru
    _

// kernel: sentiment_classifier_forward.22
$region0: #{sentiment_classifier_forward.22}
  #allocation0 [shape = 'u32[]', space=smem, size = 0x4, offset = 0x4, fixed_abs, tag = 'smem constant byte address 0x4 - core index']
  #allocation1 [shape = 'u32[144,128]{1,0:T(1,128)}', space=vmem, size = 0x12000, scoped, tag = 'internal scratch']
  #allocation2 [shape = 'f32[16,64]{1,0:T(8,128)}', space=vmem, size = 0x2000, scoped, tag = 'scratch operand']
  %s0 = inlined_call_operand.vmem [shape: bf16[16,32], index: 0, kind: input, shape index: {}]
  %s1 = inlined_call_operand.vmem [shape: bf16[32,64], index: 1, kind: input, shape index: {}]
  %s2 = inlined_call_operand.vmem [shape: f32[1,64], index: 2, kind: input, shape index: {}]
  %s3 = inlined_call_operand.vmem [shape: bf16[16,64], index: 3, kind: output, shape index: {}]
  %s4 = sld [smem:[#allocation0]]
  $region30: #{sentiment_classifier_forward.22} parent=0
    _
  %s6 = ssub.s32 1, %s4
  %s7 = scalar_select 0, %s6, %s4
  // Predicated region
  $region2: #{sentiment_classifier_forward.22} parent=0 // pred_check
    _
  $region3: #{sentiment_classifier_forward.22} parent=0 // pred_check_branch
    %9 = sbr.rel (0) target = $region5
  $region4: #{sentiment_classifier_forward.22} parent=0 // pred_region
    _
  $region5: #{sentiment_classifier_forward.22} parent=0 // pred_fallthru
    _
  // Predicated region
  $region6: #{sentiment_classifier_forward.22} parent=0 // pred_check
    _
  $region7: #{sentiment_classifier_forward.22} parent=0 // pred_check_branch
    %11 = sbr.rel (0) target = $region9
  $region8: #{sentiment_classifier_forward.22} parent=0 // pred_region
    _
  $region9: #{sentiment_classifier_forward.22} parent=0 // pred_fallthru
    _
  // Predicated region
  $region10: #{sentiment_classifier_forward.22} parent=0 // pred_check
    _
  $region11: #{sentiment_classifier_forward.22} parent=0 // pred_check_branch
    %13 = sbr.rel (0) target = $region13
  $region12: #{sentiment_classifier_forward.22} parent=0 // pred_region
    _
  $region13: #{sentiment_classifier_forward.22} parent=0 // pred_fallthru
    _
  %p15 = scmp.eq.s32.totalorder 0, 0
  // Predicated region
  $region14: #{sentiment_classifier_forward.22} parent=0 // pred_check
    %p16 = pneg %p15
  $region15: #{sentiment_classifier_forward.22} parent=0 // pred_check_branch
    %18 = sbr.rel (%p16) target = $region17
  $region16: #{sentiment_classifier_forward.22} parent=0 // pred_region
    %vm19 = vcmask 523264
    %20 = vst.msk [vmem:[#allocation2] sm:$0xff] %vm19, 0.0
    %21 = vst.msk [vmem:[#allocation2 + $0x8] sm:$0xff] %vm19, 0.0
  $region17: #{sentiment_classifier_forward.22} parent=0 // pred_fallthru
    _
  %v22 = vld [vmem:[#allocation2] sm:$0xff]
  %v23 = vld [vmem:[#allocation2 + $0x8] sm:$0xff]
  %v24 = vld [vmem:[%s0] sm:$0xf]
  %v25 = vld [vmem:[%s0 + $0x4] sm:$0xf]
  %v26 = vld [vmem:[%s1] sm:$0xf]
  %v27 = vld [vmem:[%s1 + $0x4] sm:$0xf]
  %v28 = vld [vmem:[%s1 + $0x8] sm:$0xf]
  %v29 = vld [vmem:[%s1 + $0xc] sm:$0xf]
  %v32 = vunpack.c.l.b16 %v24
  %v33 = vunpack.c.l.b16 %v25
  %v34 = vpack.c.b16 %v33, %v32
  %v39 = vunpack.c.l.b16 %v26
  %v40 = vunpack.c.l.b16 %v27
  %v41 = vunpack.c.l.b16 %v28
  %v42 = vunpack.c.l.b16 %v29
  %v43 = vpack.c.b16 %v40, %v39
  %v44 = vpack.c.b16 %v42, %v41
  %vm47 = vcmask 261120
  %v49 = vsel %vm47, %v34, 0
  %51 = vmatprep.subr.bf16.mxu0 0
  %52 = vmatpush1.bf16.msra.mxu0 0
  %53 = vmatprep.subr.bf16.mxu0 0
  %54 = vmatpush1.bf16.msra.mxu0 0
  %55 = vmatprep.subr.bf16.mxu0 0
  %56 = vmatpush1.bf16.msra.mxu0 0
  %57 = vmatprep.subr.bf16.mxu0 0
  %58 = vmatpush1.bf16.msra.mxu0 0
  %59 = vmatprep.subr.bf16.mxu0 0
  %60 = vmatpush1.bf16.msra.mxu0 0
  %61 = vmatprep.subr.bf16.mxu0 0
  %62 = vmatpush1.bf16.msra.mxu0 0
  %63 = vmatprep.subr.bf16.mxu0 0
  %64 = vmatpush1.bf16.msra.mxu0 %v44
  %65 = vmatprep.subr.bf16.mxu0 0
  %66 = vmatpush1.bf16.msra.mxu0 %v43
  %67 = vmatprep.subr.bf16.mxu0 0
  %68 = vmatpush2.bf16.msra.mxu0 0
  %69 = vmatprep.subr.bf16.mxu0 0
  %70 = vmatpush2.bf16.msra.mxu0 0
  %71 = vmatprep.subr.bf16.mxu0 0
  %72 = vmatpush2.bf16.msra.mxu0 0
  %73 = vmatprep.subr.bf16.mxu0 0
  %74 = vmatpush2.bf16.msra.mxu0 0
  %75 = vmatprep.subr.bf16.mxu0 0
  %76 = vmatpush2.bf16.msra.mxu0 0
  %77 = vmatprep.subr.bf16.mxu0 0
  %78 = vmatpush2.bf16.msra.mxu0 0
  %79 = vmatprep.subr.bf16.mxu0 0
  %80 = vmatpush2.bf16.msra.mxu0 0
  %81 = vmatprep.subr.bf16.mxu0 0
  %82 = vmatpush2.bf16.msra.mxu0 0
  %83 = vmatprep.mubr.bf16.mxu0 0
  %84 = vmatmul.mubr.bf16.gmra.mxu0 %v49
  %v85 = vpop.f32.mrf.mxu0
  %v86 = vadd.f32 0.0, %v85
  %v87 = vpop.f32.mrf.mxu0
  %v88 = vpop.f32.mrf.mxu0
  %v89 = vadd.f32 0.0, %v88
  %v90 = vpop.f32.mrf.mxu0
  %91 = vdwg.mxu0
  %v92 = vadd.f32 %v22, %v86
  %v93 = vadd.f32 %v23, %v89
  %vm94 = vcmask 523264
  %95 = vst.msk [vmem:[#allocation2] sm:$0xff] %vm94, %v92
  %96 = vst.msk [vmem:[#allocation2 + $0x8] sm:$0xff] %vm94, %v93
  // Predicated region
  $region18: #{sentiment_classifier_forward.22} parent=0 // pred_check
    %p97 = pneg %p15
  $region19: #{sentiment_classifier_forward.22} parent=0 // pred_check_branch
    %99 = sbr.rel (%p97) target = $region21
  $region20: #{sentiment_classifier_forward.22} parent=0 // pred_region
    %v100 = vld [vmem:[#allocation2] sm:$0xff]
    %v101 = vld [vmem:[#allocation2 + $0x8] sm:$0xff]
    %v102 = vld [vmem:[%s2] sm:$0x1]
    %v104 = vlaneseq
    %v105 = vshrl.u32 %v104, 7
    %v106 = vsub.s32 0, %v105
    %v107 = vrot.slane %v102, %v106
    %v109 = vadd.f32 %v100, %v107
    %v110 = vadd.f32 %v101, %v107
    %v111 = vmul.f32 %v109, 0.5
    %v112 = vmul.f32 %v110, 0.5
    %v113 = vmul.f32 %v109, 0.044715
    %v114 = vmul.f32 %v110, 0.044715
    %v115 = vmul.f32 %v113, %v109
    %v116 = vmul.f32 %v114, %v110
    %v117 = vmul.f32 %v115, %v109
    %v118 = vmul.f32 %v116, %v110
    %v119 = vadd.f32 %v109, %v117
    %v120 = vadd.f32 %v110, %v118
    %v121 = vmul.f32 %v119, 0.7978846
    %v122 = vmul.f32 %v120, 0.7978846
    %v123 = vtanh.pop %v121
    %v124 = vtanh.pop %v122
    %v125 = vadd.f32 %v123, 1.0
    %v126 = vadd.f32 %v124, 1.0
    %v127 = vmul.f32 %v111, %v125
    %v128 = vmul.f32 %v112, %v126
    %v129 = vpack.c.bf16 %v128, %v127
    %v131 = vunpack.c.l.b16 %v129
    %v132 = vunpack.c.h.b16 %v129
    %v133 = vpack.c.b16 %v131, %v131
    %v134 = vpack.c.b16 %v132, %v132
    %vm137 = vcmask 519168
    %138 = vst.msk [vmem:[%s3] sm:$0xf] %vm137, %v133
    %139 = vst.msk [vmem:[%s3 + $0x4] sm:$0xf] %vm137, %v134
  $region21: #{sentiment_classifier_forward.22} parent=0 // pred_fallthru
    _
  // Predicated region
  $region22: #{sentiment_classifier_forward.22} parent=0 // pred_check
    _
  $region23: #{sentiment_classifier_forward.22} parent=0 // pred_check_branch
    %141 = sbr.rel (0) target = $region25
  $region24: #{sentiment_classifier_forward.22} parent=0 // pred_region
    _
  $region25: #{sentiment_classifier_forward.22} parent=0 // pred_fallthru
    _
  // Predicated region
  $region26: #{sentiment_classifier_forward.22} parent=0 // pred_check
    _
  $region27: #{sentiment_classifier_forward.22} parent=0 // pred_check_branch
    %143 = sbr.rel (0) target = $region29
  $region28: #{sentiment_classifier_forward.22} parent=0 // pred_region
    _
  $region29: #{sentiment_classifier_forward.22} parent=0 // pred_fallthru
    _

// kernel: sentiment_classifier_forward.23
$region0: #{sentiment_classifier_forward.23}
  #allocation0 [shape = 'u32[]', space=smem, size = 0x4, offset = 0x4, fixed_abs, tag = 'smem constant byte address 0x4 - core index']
  #allocation1 [shape = 'u32[144,128]{1,0:T(1,128)}', space=vmem, size = 0x12000, scoped, tag = 'internal scratch']
  #allocation2 [shape = 'f32[16,32]{1,0:T(8,128)}', space=vmem, size = 0x2000, scoped, tag = 'scratch operand']
  %s0 = inlined_call_operand.vmem [shape: bf16[16,64], index: 0, kind: input, shape index: {}]
  %s1 = inlined_call_operand.vmem [shape: bf16[64,32], index: 1, kind: input, shape index: {}]
  %s2 = inlined_call_operand.vmem [shape: f32[1,32], index: 2, kind: input, shape index: {}]
  %s3 = inlined_call_operand.vmem [shape: bf16[16,32], index: 3, kind: output, shape index: {}]
  %s4 = sld [smem:[#allocation0]]
  $region30: #{sentiment_classifier_forward.23} parent=0
    _
  %s6 = ssub.s32 1, %s4
  %s7 = scalar_select 0, %s6, %s4
  // Predicated region
  $region2: #{sentiment_classifier_forward.23} parent=0 // pred_check
    _
  $region3: #{sentiment_classifier_forward.23} parent=0 // pred_check_branch
    %9 = sbr.rel (0) target = $region5
  $region4: #{sentiment_classifier_forward.23} parent=0 // pred_region
    _
  $region5: #{sentiment_classifier_forward.23} parent=0 // pred_fallthru
    _
  // Predicated region
  $region6: #{sentiment_classifier_forward.23} parent=0 // pred_check
    _
  $region7: #{sentiment_classifier_forward.23} parent=0 // pred_check_branch
    %11 = sbr.rel (0) target = $region9
  $region8: #{sentiment_classifier_forward.23} parent=0 // pred_region
    _
  $region9: #{sentiment_classifier_forward.23} parent=0 // pred_fallthru
    _
  // Predicated region
  $region10: #{sentiment_classifier_forward.23} parent=0 // pred_check
    _
  $region11: #{sentiment_classifier_forward.23} parent=0 // pred_check_branch
    %13 = sbr.rel (0) target = $region13
  $region12: #{sentiment_classifier_forward.23} parent=0 // pred_region
    _
  $region13: #{sentiment_classifier_forward.23} parent=0 // pred_fallthru
    _
  %p15 = scmp.eq.s32.totalorder 0, 0
  // Predicated region
  $region14: #{sentiment_classifier_forward.23} parent=0 // pred_check
    %p16 = pneg %p15
  $region15: #{sentiment_classifier_forward.23} parent=0 // pred_check_branch
    %18 = sbr.rel (%p16) target = $region17
  $region16: #{sentiment_classifier_forward.23} parent=0 // pred_region
    %vm19 = vcmask 261120
    %20 = vst.msk [vmem:[#allocation2] sm:$0xff] %vm19, 0.0
    %21 = vst.msk [vmem:[#allocation2 + $0x8] sm:$0xff] %vm19, 0.0
  $region17: #{sentiment_classifier_forward.23} parent=0 // pred_fallthru
    _
  %v22 = vld [vmem:[#allocation2] sm:$0xff]
  %v23 = vld [vmem:[#allocation2 + $0x8] sm:$0xff]
  %v24 = vld [vmem:[%s0] sm:$0xf]
  %v25 = vld [vmem:[%s0 + $0x4] sm:$0xf]
  %v26 = vld [vmem:[%s1] sm:$0xf]
  %v27 = vld [vmem:[%s1 + $0x4] sm:$0xf]
  %v28 = vld [vmem:[%s1 + $0x8] sm:$0xf]
  %v29 = vld [vmem:[%s1 + $0xc] sm:$0xf]
  %v30 = vld [vmem:[%s1 + $0x10] sm:$0xf]
  %v31 = vld [vmem:[%s1 + $0x14] sm:$0xf]
  %v32 = vld [vmem:[%s1 + $0x18] sm:$0xf]
  %v33 = vld [vmem:[%s1 + $0x1c] sm:$0xf]
  %v36 = vunpack.c.l.b16 %v24
  %v37 = vunpack.c.l.b16 %v25
  %v38 = vpack.c.b16 %v37, %v36
  %v47 = vunpack.c.l.b16 %v26
  %v48 = vunpack.c.l.b16 %v27
  %v49 = vunpack.c.l.b16 %v28
  %v50 = vunpack.c.l.b16 %v29
  %v51 = vunpack.c.l.b16 %v30
  %v52 = vunpack.c.l.b16 %v31
  %v53 = vunpack.c.l.b16 %v32
  %v54 = vunpack.c.l.b16 %v33
  %v55 = vpack.c.b16 %v48, %v47
  %v56 = vpack.c.b16 %v50, %v49
  %v57 = vpack.c.b16 %v52, %v51
  %v58 = vpack.c.b16 %v54, %v53
  %vm63 = vcmask 523264
  %v65 = vsel %vm63, %v38, 0
  %67 = vmatprep.subr.bf16.mxu0 0
  %68 = vmatpush1.bf16.msra.mxu0 0
  %69 = vmatprep.subr.bf16.mxu0 0
  %70 = vmatpush1.bf16.msra.mxu0 0
  %71 = vmatprep.subr.bf16.mxu0 0
  %72 = vmatpush1.bf16.msra.mxu0 0
  %73 = vmatprep.subr.bf16.mxu0 0
  %74 = vmatpush1.bf16.msra.mxu0 0
  %75 = vmatprep.subr.bf16.mxu0 0
  %76 = vmatpush1.bf16.msra.mxu0 %v58
  %77 = vmatprep.subr.bf16.mxu0 0
  %78 = vmatpush1.bf16.msra.mxu0 %v57
  %79 = vmatprep.subr.bf16.mxu0 0
  %80 = vmatpush1.bf16.msra.mxu0 %v56
  %81 = vmatprep.subr.bf16.mxu0 0
  %82 = vmatpush1.bf16.msra.mxu0 %v55
  %83 = vmatprep.subr.bf16.mxu0 0
  %84 = vmatpush2.bf16.msra.mxu0 0
  %85 = vmatprep.subr.bf16.mxu0 0
  %86 = vmatpush2.bf16.msra.mxu0 0
  %87 = vmatprep.subr.bf16.mxu0 0
  %88 = vmatpush2.bf16.msra.mxu0 0
  %89 = vmatprep.subr.bf16.mxu0 0
  %90 = vmatpush2.bf16.msra.mxu0 0
  %91 = vmatprep.subr.bf16.mxu0 0
  %92 = vmatpush2.bf16.msra.mxu0 0
  %93 = vmatprep.subr.bf16.mxu0 0
  %94 = vmatpush2.bf16.msra.mxu0 0
  %95 = vmatprep.subr.bf16.mxu0 0
  %96 = vmatpush2.bf16.msra.mxu0 0
  %97 = vmatprep.subr.bf16.mxu0 0
  %98 = vmatpush2.bf16.msra.mxu0 0
  %99 = vmatprep.mubr.bf16.mxu0 0
  %100 = vmatmul.mubr.bf16.gmra.mxu0 %v65
  %v101 = vpop.f32.mrf.mxu0
  %v102 = vadd.f32 0.0, %v101
  %v103 = vpop.f32.mrf.mxu0
  %v104 = vpop.f32.mrf.mxu0
  %v105 = vadd.f32 0.0, %v104
  %v106 = vpop.f32.mrf.mxu0
  %107 = vdwg.mxu0
  %v108 = vadd.f32 %v22, %v102
  %v109 = vadd.f32 %v23, %v105
  %vm110 = vcmask 261120
  %111 = vst.msk [vmem:[#allocation2] sm:$0xff] %vm110, %v108
  %112 = vst.msk [vmem:[#allocation2 + $0x8] sm:$0xff] %vm110, %v109
  // Predicated region
  $region18: #{sentiment_classifier_forward.23} parent=0 // pred_check
    %p113 = pneg %p15
  $region19: #{sentiment_classifier_forward.23} parent=0 // pred_check_branch
    %115 = sbr.rel (%p113) target = $region21
  $region20: #{sentiment_classifier_forward.23} parent=0 // pred_region
    %v116 = vld [vmem:[#allocation2] sm:$0xff]
    %v117 = vld [vmem:[#allocation2 + $0x8] sm:$0xff]
    %v118 = vld [vmem:[%s2] sm:$0x1]
    %v120 = vlaneseq
    %v121 = vshrl.u32 %v120, 7
    %v122 = vsub.s32 0, %v121
    %v123 = vrot.slane %v118, %v122
    %v125 = vadd.f32 %v116, %v123
    %v126 = vadd.f32 %v117, %v123
    %v127 = vpack.c.bf16 %v126, %v125
    %v129 = vunpack.c.l.b16 %v127
    %v130 = vunpack.c.h.b16 %v127
    %v131 = vpack.c.b16 %v129, %v129
    %v132 = vpack.c.b16 %v130, %v130
    %vm135 = vcmask 257024
    %136 = vst.msk [vmem:[%s3] sm:$0xf] %vm135, %v131
    %137 = vst.msk [vmem:[%s3 + $0x4] sm:$0xf] %vm135, %v132
  $region21: #{sentiment_classifier_forward.23} parent=0 // pred_fallthru
    _
  // Predicated region
  $region22: #{sentiment_classifier_forward.23} parent=0 // pred_check
    _
  $region23: #{sentiment_classifier_forward.23} parent=0 // pred_check_branch
    %139 = sbr.rel (0) target = $region25
  $region24: #{sentiment_classifier_forward.23} parent=0 // pred_region
    _
  $region25: #{sentiment_classifier_forward.23} parent=0 // pred_fallthru
    _
  // Predicated region
  $region26: #{sentiment_classifier_forward.23} parent=0 // pred_check
    _
  $region27: #{sentiment_classifier_forward.23} parent=0 // pred_check_branch
    %141 = sbr.rel (0) target = $region29
  $region28: #{sentiment_classifier_forward.23} parent=0 // pred_region
    _
  $region29: #{sentiment_classifier_forward.23} parent=0 // pred_fallthru
    _

// kernel: sentiment_classifier_forward.32
$region0: #{sentiment_classifier_forward.32}
  #allocation0 [shape = 'u32[]', space=smem, size = 0x4, offset = 0x4, fixed_abs, tag = 'smem constant byte address 0x4 - core index']
  #allocation1 [shape = 'u32[144,128]{1,0:T(1,128)}', space=vmem, size = 0x12000, scoped, tag = 'internal scratch']
  #allocation2 [shape = 'f32[2,32]{1,0:T(2,128)}', space=vmem, size = 0x400, scoped, tag = 'scratch operand']
  %s0 = inlined_call_operand.vmem [shape: bf16[2,32], index: 0, kind: input, shape index: {}]
  %s1 = inlined_call_operand.vmem [shape: bf16[32,32], index: 1, kind: input, shape index: {}]
  %s2 = inlined_call_operand.vmem [shape: f32[1,32], index: 2, kind: input, shape index: {}]
  %s3 = inlined_call_operand.vmem [shape: bf16[2,32], index: 3, kind: output, shape index: {}]
  %s4 = sld [smem:[#allocation0]]
  $region30: #{sentiment_classifier_forward.32} parent=0
    _
  %s6 = ssub.s32 1, %s4
  %s7 = scalar_select 0, %s6, %s4
  // Predicated region
  $region2: #{sentiment_classifier_forward.32} parent=0 // pred_check
    _
  $region3: #{sentiment_classifier_forward.32} parent=0 // pred_check_branch
    %9 = sbr.rel (0) target = $region5
  $region4: #{sentiment_classifier_forward.32} parent=0 // pred_region
    _
  $region5: #{sentiment_classifier_forward.32} parent=0 // pred_fallthru
    _
  // Predicated region
  $region6: #{sentiment_classifier_forward.32} parent=0 // pred_check
    _
  $region7: #{sentiment_classifier_forward.32} parent=0 // pred_check_branch
    %11 = sbr.rel (0) target = $region9
  $region8: #{sentiment_classifier_forward.32} parent=0 // pred_region
    _
  $region9: #{sentiment_classifier_forward.32} parent=0 // pred_fallthru
    _
  // Predicated region
  $region10: #{sentiment_classifier_forward.32} parent=0 // pred_check
    _
  $region11: #{sentiment_classifier_forward.32} parent=0 // pred_check_branch
    %13 = sbr.rel (0) target = $region13
  $region12: #{sentiment_classifier_forward.32} parent=0 // pred_region
    _
  $region13: #{sentiment_classifier_forward.32} parent=0 // pred_fallthru
    _
  %p15 = scmp.eq.s32.totalorder 0, 0
  // Predicated region
  $region14: #{sentiment_classifier_forward.32} parent=0 // pred_check
    %p16 = pneg %p15
  $region15: #{sentiment_classifier_forward.32} parent=0 // pred_check_branch
    %18 = sbr.rel (%p16) target = $region17
  $region16: #{sentiment_classifier_forward.32} parent=0 // pred_region
    %vm19 = vcmask 254976
    %20 = vst.msk [vmem:[#allocation2] sm:$0x3] %vm19, 0.0
  $region17: #{sentiment_classifier_forward.32} parent=0 // pred_fallthru
    _
  %v21 = vld [vmem:[#allocation2] sm:$0x3]
  %v22 = vld [vmem:[%s0] sm:$0x1]
  %v23 = vld [vmem:[%s1] sm:$0xf]
  %v24 = vld [vmem:[%s1 + $0x4] sm:$0xf]
  %v25 = vld [vmem:[%s1 + $0x8] sm:$0xf]
  %v26 = vld [vmem:[%s1 + $0xc] sm:$0xf]
  %v31 = vunpack.c.l.b16 %v23
  %v32 = vunpack.c.l.b16 %v24
  %v33 = vunpack.c.l.b16 %v25
  %v34 = vunpack.c.l.b16 %v26
  %v35 = vpack.c.b16 %v32, %v31
  %v36 = vpack.c.b16 %v34, %v33
  %vm39 = vcmask 261120
  %v41 = vsel %vm39, %v22, 0
  %43 = vmatprep.subr.bf16.mxu0 0
  %44 = vmatpush1.bf16.msra.mxu0 0
  %45 = vmatprep.subr.bf16.mxu0 0
  %46 = vmatpush1.bf16.msra.mxu0 0
  %47 = vmatprep.subr.bf16.mxu0 0
  %48 = vmatpush1.bf16.msra.mxu0 0
  %49 = vmatprep.subr.bf16.mxu0 0
  %50 = vmatpush1.bf16.msra.mxu0 0
  %51 = vmatprep.subr.bf16.mxu0 0
  %52 = vmatpush1.bf16.msra.mxu0 0
  %53 = vmatprep.subr.bf16.mxu0 0
  %54 = vmatpush1.bf16.msra.mxu0 0
  %55 = vmatprep.subr.bf16.mxu0 0
  %56 = vmatpush1.bf16.msra.mxu0 %v36
  %57 = vmatprep.subr.bf16.mxu0 0
  %58 = vmatpush1.bf16.msra.mxu0 %v35
  %59 = vmatprep.subr.bf16.mxu0 0
  %60 = vmatpush2.bf16.msra.mxu0 0
  %61 = vmatprep.subr.bf16.mxu0 0
  %62 = vmatpush2.bf16.msra.mxu0 0
  %63 = vmatprep.subr.bf16.mxu0 0
  %64 = vmatpush2.bf16.msra.mxu0 0
  %65 = vmatprep.subr.bf16.mxu0 0
  %66 = vmatpush2.bf16.msra.mxu0 0
  %67 = vmatprep.subr.bf16.mxu0 0
  %68 = vmatpush2.bf16.msra.mxu0 0
  %69 = vmatprep.subr.bf16.mxu0 0
  %70 = vmatpush2.bf16.msra.mxu0 0
  %71 = vmatprep.subr.bf16.mxu0 0
  %72 = vmatpush2.bf16.msra.mxu0 0
  %73 = vmatprep.subr.bf16.mxu0 0
  %74 = vmatpush2.bf16.msra.mxu0 0
  %75 = vmatprep.mubr.bf16.mxu0 0
  %76 = vmatmul.mubr.bf16.gmra.mxu0 %v41
  %v77 = vpop.f32.mrf.mxu0
  %v78 = vadd.f32 0.0, %v77
  %v79 = vpop.f32.mrf.mxu0
  %v80 = vpop.f32.mrf.mxu0
  %v81 = vpop.f32.mrf.mxu0
  %82 = vdwg.mxu0
  %v83 = vadd.f32 %v21, %v78
  %vm84 = vcmask 254976
  %85 = vst.msk [vmem:[#allocation2] sm:$0x3] %vm84, %v83
  // Predicated region
  $region18: #{sentiment_classifier_forward.32} parent=0 // pred_check
    %p86 = pneg %p15
  $region19: #{sentiment_classifier_forward.32} parent=0 // pred_check_branch
    %88 = sbr.rel (%p86) target = $region21
  $region20: #{sentiment_classifier_forward.32} parent=0 // pred_region
    %v89 = vld [vmem:[#allocation2] sm:$0x3]
    %v90 = vld [vmem:[%s2] sm:$0x1]
    %v92 = vlaneseq
    %v93 = vshrl.u32 %v92, 7
    %v94 = vsub.s32 0, %v93
    %v95 = vrot.slane %v90, %v94
    %v97 = vadd.f32 %v89, %v95
    %v98 = vtanh.pop %v97
    %v99 = vpack.c.bf16 %v98, %v98
    %vm100 = vcmask 253952
    %101 = vst.msk [vmem:[%s3] sm:$0x1] %vm100, %v99
  $region21: #{sentiment_classifier_forward.32} parent=0 // pred_fallthru
    _
  // Predicated region
  $region22: #{sentiment_classifier_forward.32} parent=0 // pred_check
    _
  $region23: #{sentiment_classifier_forward.32} parent=0 // pred_check_branch
    %103 = sbr.rel (0) target = $region25
  $region24: #{sentiment_classifier_forward.32} parent=0 // pred_region
    _
  $region25: #{sentiment_classifier_forward.32} parent=0 // pred_fallthru
    _
  // Predicated region
  $region26: #{sentiment_classifier_forward.32} parent=0 // pred_check
    _
  $region27: #{sentiment_classifier_forward.32} parent=0 // pred_check_branch
    %105 = sbr.rel (0) target = $region29
  $region28: #{sentiment_classifier_forward.32} parent=0 // pred_region
    _
  $region29: #{sentiment_classifier_forward.32} parent=0 // pred_fallthru
    _

// kernel: sentiment_classifier_forward.33
$region0: #{sentiment_classifier_forward.33}
  #allocation0 [shape = 'u32[]', space=smem, size = 0x4, offset = 0x4, fixed_abs, tag = 'smem constant byte address 0x4 - core index']
  #allocation1 [shape = 'u32[144,128]{1,0:T(1,128)}', space=vmem, size = 0x12000, scoped, tag = 'internal scratch']
  #allocation2 [shape = 'f32[2,3]{1,0:T(2,128)}', space=vmem, size = 0x400, scoped, tag = 'scratch operand']
  %s0 = inlined_call_operand.vmem [shape: bf16[2,32], index: 0, kind: input, shape index: {}]
  %s1 = inlined_call_operand.vmem [shape: bf16[32,3], index: 1, kind: input, shape index: {}]
  %s2 = inlined_call_operand.vmem [shape: f32[1,3], index: 2, kind: input, shape index: {}]
  %s3 = inlined_call_operand.hbm [shape: f32[2,3], index: 3, kind: output, shape index: {}]
  %s4 = sld [smem:[#allocation0]]
  $region30: #{sentiment_classifier_forward.33} parent=0
    _
  %s6 = ssub.s32 1, %s4
  %s7 = scalar_select 0, %s6, %s4
  $region1: #{sentiment_classifier_forward.33} parent=0
    #allocation3 [shape = 'u8[1024]{0}', space=vmem, size = 0x400, scoped, tag = 'output window, operand 0, single buffered']
    #allocation4 [shape = 's32[1]{0}', space=sflag, size = 0x4, scoped, tag = 'scoped memory for sentiment_classifier_forward.33']
    %8 = vsyncpa [#allocation4], 0
    // Predicated region
    $region2: #{sentiment_classifier_forward.33} parent=1 // pred_check
      _
    $region3: #{sentiment_classifier_forward.33} parent=1 // pred_check_branch
      %10 = sbr.rel (0) target = $region5
    $region4: #{sentiment_classifier_forward.33} parent=1 // pred_region
      _
    $region5: #{sentiment_classifier_forward.33} parent=1 // pred_fallthru
      _
    // Predicated region
    $region6: #{sentiment_classifier_forward.33} parent=1 // pred_check
      _
    $region7: #{sentiment_classifier_forward.33} parent=1 // pred_check_branch
      %12 = sbr.rel (0) target = $region9
    $region8: #{sentiment_classifier_forward.33} parent=1 // pred_region
      _
    $region9: #{sentiment_classifier_forward.33} parent=1 // pred_fallthru
      _
    // Predicated region
    $region10: #{sentiment_classifier_forward.33} parent=1 // pred_check
      _
    $region11: #{sentiment_classifier_forward.33} parent=1 // pred_check_branch
      %14 = sbr.rel (0) target = $region13
    $region12: #{sentiment_classifier_forward.33} parent=1 // pred_region
      _
    $region13: #{sentiment_classifier_forward.33} parent=1 // pred_fallthru
      _
    %p16 = scmp.eq.s32.totalorder 0, 0
    // Predicated region
    $region14: #{sentiment_classifier_forward.33} parent=1 // pred_check
      %p17 = pneg %p16
    $region15: #{sentiment_classifier_forward.33} parent=1 // pred_check_branch
      %19 = sbr.rel (%p17) target = $region17
    $region16: #{sentiment_classifier_forward.33} parent=1 // pred_region
      %vm20 = vcmask 17408
      %21 = vst.msk [vmem:[#allocation2] sm:$0x3] %vm20, 0.0
    $region17: #{sentiment_classifier_forward.33} parent=1 // pred_fallthru
      _
    %v22 = vld [vmem:[#allocation2] sm:$0x3]
    %v23 = vld [vmem:[%s0] sm:$0x1]
    %v24 = vld [vmem:[%s1] sm:$0xf]
    %v25 = vld [vmem:[%s1 + $0x4] sm:$0xf]
    %v26 = vld [vmem:[%s1 + $0x8] sm:$0xf]
    %v27 = vld [vmem:[%s1 + $0xc] sm:$0xf]
    %v32 = vunpack.c.l.b16 %v24
    %v33 = vunpack.c.l.b16 %v25
    %v34 = vunpack.c.l.b16 %v26
    %v35 = vunpack.c.l.b16 %v27
    %v36 = vpack.c.b16 %v33, %v32
    %v37 = vpack.c.b16 %v35, %v34
    %vm40 = vcmask 261120
    %v42 = vsel %vm40, %v23, 0
    %44 = vmatprep.subr.bf16.mxu0 0
    %45 = vmatpush1.bf16.msra.mxu0 0
    %46 = vmatprep.subr.bf16.mxu0 0
    %47 = vmatpush1.bf16.msra.mxu0 0
    %48 = vmatprep.subr.bf16.mxu0 0
    %49 = vmatpush1.bf16.msra.mxu0 0
    %50 = vmatprep.subr.bf16.mxu0 0
    %51 = vmatpush1.bf16.msra.mxu0 0
    %52 = vmatprep.subr.bf16.mxu0 0
    %53 = vmatpush1.bf16.msra.mxu0 0
    %54 = vmatprep.subr.bf16.mxu0 0
    %55 = vmatpush1.bf16.msra.mxu0 0
    %56 = vmatprep.subr.bf16.mxu0 0
    %57 = vmatpush1.bf16.msra.mxu0 %v37
    %58 = vmatprep.subr.bf16.mxu0 0
    %59 = vmatpush1.bf16.msra.mxu0 %v36
    %60 = vmatprep.subr.bf16.mxu0 0
    %61 = vmatpush2.bf16.msra.mxu0 0
    %62 = vmatprep.subr.bf16.mxu0 0
    %63 = vmatpush2.bf16.msra.mxu0 0
    %64 = vmatprep.subr.bf16.mxu0 0
    %65 = vmatpush2.bf16.msra.mxu0 0
    %66 = vmatprep.subr.bf16.mxu0 0
    %67 = vmatpush2.bf16.msra.mxu0 0
    %68 = vmatprep.subr.bf16.mxu0 0
    %69 = vmatpush2.bf16.msra.mxu0 0
    %70 = vmatprep.subr.bf16.mxu0 0
    %71 = vmatpush2.bf16.msra.mxu0 0
    %72 = vmatprep.subr.bf16.mxu0 0
    %73 = vmatpush2.bf16.msra.mxu0 0
    %74 = vmatprep.subr.bf16.mxu0 0
    %75 = vmatpush2.bf16.msra.mxu0 0
    %76 = vmatprep.mubr.bf16.mxu0 0
    %77 = vmatmul.mubr.bf16.gmra.mxu0 %v42
    %v78 = vpop.f32.mrf.mxu0
    %v79 = vadd.f32 0.0, %v78
    %v80 = vpop.f32.mrf.mxu0
    %v81 = vpop.f32.mrf.mxu0
    %v82 = vpop.f32.mrf.mxu0
    %83 = vdwg.mxu0
    %v84 = vadd.f32 %v22, %v79
    %vm85 = vcmask 17408
    %86 = vst.msk [vmem:[#allocation2] sm:$0x3] %vm85, %v84
    // Predicated region
    $region18: #{sentiment_classifier_forward.33} parent=1 // pred_check
      %p87 = pneg %p16
    $region19: #{sentiment_classifier_forward.33} parent=1 // pred_check_branch
      %89 = sbr.rel (%p87) target = $region21
    $region20: #{sentiment_classifier_forward.33} parent=1 // pred_region
      %v90 = vld [vmem:[#allocation2] sm:$0x3]
      %v91 = vld [vmem:[%s2] sm:$0x1]
      %v93 = vlaneseq
      %v94 = vshrl.u32 %v93, 7
      %v95 = vsub.s32 0, %v94
      %v96 = vrot.slane %v91, %v95
      %v98 = vadd.f32 %v90, %v96
      %99 = vst.msk [vmem:[#allocation3] sm:$0x3] %vm85, %v98
    $region21: #{sentiment_classifier_forward.33} parent=1 // pred_fallthru
      _
    // Predicated region
    $region22: #{sentiment_classifier_forward.33} parent=1 // pred_check
      _
    $region23: #{sentiment_classifier_forward.33} parent=1 // pred_check_branch
      %101 = sbr.rel (0) target = $region25
    $region24: #{sentiment_classifier_forward.33} parent=1 // pred_region
      %s103 = ssub.s32 32, 32
      %104 = vsyncadd [#allocation4], %s103
      %s106 = sshll.u32 [#allocation3], 4
      %s107 = int_to_ptr.vmem [resolvable:$true] %s106
      %109 = dma.vmem_to_hbm [thread:$0]  %s107, 32, %s3, [#allocation4]
    $region25: #{sentiment_classifier_forward.33} parent=1 // pred_fallthru
      _
    // Predicated region
    $region26: #{sentiment_classifier_forward.33} parent=1 // pred_check
      _
    $region27: #{sentiment_classifier_forward.33} parent=1 // pred_check_branch
      %111 = sbr.rel (0) target = $region29
    $region28: #{sentiment_classifier_forward.33} parent=1 // pred_region
      %112 = dma.done [#allocation4], 32
    $region29: #{sentiment_classifier_forward.33} parent=1 // pred_fallthru
      _
    %113 = vsyncpa [#allocation4], 1

</llo_original>
